<compile_context>
chip_gen: v7x
topology: tpu7x:2x2x1
jax: 0.10.0
libtpu: 0.0.40
codegen_flags: <defaults>
</compile_context>

<pallas_src>
import numpy as np
import jax
import jax.numpy as jnp
from jax.experimental import pallas as pl
from jax.experimental.pallas import tpu as pltpu

# ------------------------- config (mirrors __init__ choices) -------------------------
B = 2                         # batch
MAX_LEN = 16                  # config.max_len (power of 2)
VOCAB = 64                    # config.emb_shape[0]
EMB_DIM = 32                  # config.emb_shape[1] == first_c_size ('dict' embedding)
NUM_CHANNELS = [48, 48, 32]   # TemporalConvNet num_channels
KERNEL_SIZE = 2               # TCN kernel_size
MLP_SIZES = [64, 3]           # classifier_mlp_sizes  -> tdd_conf = [32, 64, 3]

BL = B * MAX_LEN
LOG2_LEN = MAX_LEN.bit_length() - 1

_COMPILER = pltpu.CompilerParams(dimension_semantics=("arbitrary",))


def _full_spec(shape):
    nd = len(shape)
    return pl.BlockSpec(shape, lambda i, nd=nd: (0,) * nd)


# --------------------------- one-time weight packing (hoisted) --------------------------
def pack_params(params):
    """Pack embedding + every weight/bias into ONE lane-dense (R, 128) f32 slab.

    Each entry sits at lane offset 0 and an 8-aligned row offset, so the kernel
    reads it with a free static slice.  Runs once at init (numpy); nothing here
    is dispatched per forward call.
    """
    segs, layout = [], {}
    off = 0

    def add(name, arr):
        nonlocal off
        a = np.asarray(arr, np.float32)
        if a.ndim == 1:
            a = a[None, :]
        r, c = a.shape
        pad_r = (-r) % 8
        segs.append(np.pad(a, ((0, pad_r), (0, 128 - c))))
        layout[name] = (off, r, c)
        off += r + pad_r

    add("emb", params["emb"])                                   # (VOCAB, EMB_DIM)

    block_meta = []
    in_ch = EMB_DIM
    for i, (blk, out_ch) in enumerate(zip(params["tcn"], NUM_CHANNELS)):
        has_ds = "wd" in blk
        add(f"w1a_{i}", blk["w1"][0])                           # dilated (shifted) tap
        add(f"w1b_{i}", blk["w1"][1])                           # current tap
        add(f"b1_{i}", blk["b1"])
        add(f"w2a_{i}", blk["w2"][0])
        add(f"w2b_{i}", blk["w2"][1])
        add(f"b2_{i}", blk["b2"])
        if has_ds:
            add(f"wd_{i}", blk["wd"])
            add(f"bd_{i}", blk["bd"])
        block_meta.append((in_ch, out_ch, has_ds, 2 ** i))
        in_ch = out_ch

    add("wc1", params["clf"]["w1"])
    add("bc1", params["clf"]["b1"])
    add("wc2", params["clf"]["w2"])
    add("bc2", params["clf"]["b2"])

    slab = jnp.asarray(np.concatenate(segs, axis=0))            # (R, 128) f32
    return slab, layout, tuple(block_meta)


# ------------------------------- fused Pallas kernel -----------------------------------
def make_fused_kernel(layout, block_meta):
    def rd(w_ref, name):
        off, r, c = layout[name]
        return w_ref[off:off + r, :c]                           # static slice, lane offset 0

    def kernel(idx_ref, w_ref, o_ref):
        # --- embedding lookup fused as a one-hot MXU matmul (no XLA gather) ---
        ids = idx_ref[...]                                      # (BL, 1) int32
        vocab_iota = jax.lax.broadcasted_iota(jnp.int32, (BL, VOCAB), 1)
        onehot = jnp.where(vocab_iota == ids, 1.0, 0.0)         # (BL, VOCAB) f32
        x = jnp.dot(onehot, rd(w_ref, "emb"),
                    preferred_element_type=jnp.float32)         # (BL, EMB_DIM)

        # within-sequence time index (rows are batch-major time)
        row = jax.lax.broadcasted_iota(jnp.int32, (BL, 1), 0)
        t = row & (MAX_LEN - 1)

        for i, (cin, cout, has_ds, dil) in enumerate(block_meta):
            mask = t >= dil                                     # hoisted; shared by both convs

            def shift(v, dil=dil, mask=mask):
                # causal shift by `dil` rows: XLU roll; wrapped / cross-sequence
                # rows are exactly the rows with t < dil, which the mask zeroes.
                return jnp.where(mask, pltpu.roll(v, dil, 0), 0.0)

            w1a, w1b, b1 = rd(w_ref, f"w1a_{i}"), rd(w_ref, f"w1b_{i}"), rd(w_ref, f"b1_{i}")
            w2a, w2b, b2 = rd(w_ref, f"w2a_{i}"), rd(w_ref, f"w2b_{i}"), rd(w_ref, f"b2_{i}")

            # conv1: two separate MXU pushes summed (no lane-axis concat)
            h = (jnp.dot(shift(x), w1a, preferred_element_type=jnp.float32)
                 + jnp.dot(x, w1b, preferred_element_type=jnp.float32) + b1)
            h = jnp.maximum(h, 0.0)                             # chomp+relu (+dropout=id)
            # conv2
            h2 = (jnp.dot(shift(h), w2a, preferred_element_type=jnp.float32)
                  + jnp.dot(h, w2b, preferred_element_type=jnp.float32) + b2)
            h2 = jnp.maximum(h2, 0.0)
            # residual: standalone 1x1 projection (no fused lane split)
            if has_ds:
                res = (jnp.dot(x, rd(w_ref, f"wd_{i}"),
                               preferred_element_type=jnp.float32) + rd(w_ref, f"bd_{i}"))
            else:
                res = x
            x = jnp.maximum(h2 + res, 0.0)                      # block output

        # pooling_type == 0 (cnn path): mean over time as a lane-dense matmul
        colb = jax.lax.broadcasted_iota(jnp.int32, (B, BL), 1) >> LOG2_LEN
        rowb = jax.lax.broadcasted_iota(jnp.int32, (B, BL), 0)
        pmat = jnp.where(colb == rowb, 1.0 / MAX_LEN, 0.0)
        pooled = jnp.dot(pmat, x, preferred_element_type=jnp.float32)   # (B, C)

        # MLP classifier: Dropout(id), Linear, ReLU, Dropout(id), Linear
        hcl = jnp.maximum(
            jnp.dot(pooled, rd(w_ref, "wc1"),
                    preferred_element_type=jnp.float32) + rd(w_ref, "bc1"), 0.0)
        o_ref[...] = (jnp.dot(hcl, rd(w_ref, "wc2"),
                              preferred_element_type=jnp.float32) + rd(w_ref, "bc2"))

    return kernel


# ------------------------------- wrapper ------------------------------------------------
def make_forward(slab_shape, layout, block_meta):
    kernel = make_fused_kernel(layout, block_meta)
    n_out = MLP_SIZES[-1]

    # rough cost estimate so XLA can schedule around the custom call
    flops = 2 * BL * VOCAB * EMB_DIM                           # one-hot embedding matmul
    for (cin, cout, has_ds, _d) in block_meta:
        flops += 2 * (2 * BL * cin * cout)                     # conv1 (2 taps)
        flops += 2 * (2 * BL * cout * cout)                    # conv2 (2 taps)
        if has_ds:
            flops += 2 * BL * cin * cout                       # 1x1 residual projection
    flops += 2 * B * BL * NUM_CHANNELS[-1]                     # mean pool
    flops += 2 * B * NUM_CHANNELS[-1] * MLP_SIZES[0]
    flops += 2 * B * MLP_SIZES[0] * MLP_SIZES[1]
    bytes_accessed = int(np.prod(slab_shape)) * 4 + BL * 4 + B * n_out * 4
    cost = pl.CostEstimate(flops=int(flops), transcendentals=0,
                           bytes_accessed=int(bytes_accessed))

    call = pl.pallas_call(
        kernel,
        out_shape=jax.ShapeDtypeStruct((B, n_out), jnp.float32),
        grid=(1,),
        in_specs=[_full_spec((BL, 1)), _full_spec(slab_shape)],
        out_specs=_full_spec((B, n_out)),
        compiler_params=_COMPILER,
        cost_estimate=cost,
    )

    def forward(w_slab, c_seq, c_cat=None):
        # c_cat only carries batch size in this config (cat_sizes=[]); unused here.
        ids = c_seq.reshape(BL, 1).astype(jnp.int32)            # trivial reshape; gather is in-kernel
        return call(ids, w_slab)

    return forward


# ------------------------------- parameters --------------------------------------------
def _weight_norm_eff(v):
    # weight_norm(dim=0): w = g * v / ||v||, with g initialized to ||v|| (identity at init,
    # matching PyTorch's state right after construction).
    g = jnp.sqrt(jnp.sum(v * v, axis=(1, 2)))
    return v * (g / jnp.sqrt(jnp.sum(v * v, axis=(1, 2))))[:, None, None]


def init_params(key):
    ks = jax.random.split(key, 32)
    ki = 0

    def nk():
        nonlocal ki
        k = ks[ki]
        ki += 1
        return k

    params = {"emb": jax.random.normal(nk(), (VOCAB, EMB_DIM), jnp.float32)}

    tcn = []
    in_ch = EMB_DIM
    for out_ch in NUM_CHANNELS:
        blk = {}
        for name, (ci, co) in (("1", (in_ch, out_ch)), ("2", (out_ch, out_ch))):
            v = 0.01 * jax.random.normal(nk(), (co, ci, KERNEL_SIZE), jnp.float32)
            w = _weight_norm_eff(v)                        # (Cout, Cin, K) PyTorch layout
            blk["w" + name] = jnp.transpose(w, (2, 1, 0))  # -> (K, Cin, Cout) for kernel
            blk["b" + name] = 0.01 * jax.random.normal(nk(), (1, co), jnp.float32)
        if in_ch != out_ch:                                # downsample 1x1 conv
            wd = 0.01 * jax.random.normal(nk(), (out_ch, in_ch, 1), jnp.float32)
            blk["wd"] = jnp.transpose(wd[:, :, 0], (1, 0))  # (Cin, Cout)
            blk["bd"] = 0.01 * jax.random.normal(nk(), (1, out_ch), jnp.float32)
        tcn.append(blk)
        in_ch = out_ch
    params["tcn"] = tcn

    last_c = NUM_CHANNELS[-1]
    params["clf"] = {
        "w1": 0.1 * jax.random.normal(nk(), (last_c, MLP_SIZES[0]), jnp.float32),
        "b1": 0.1 * jax.random.normal(nk(), (1, MLP_SIZES[0]), jnp.float32),
        "w2": 0.1 * jax.random.normal(nk(), (MLP_SIZES[0], MLP_SIZES[1]), jnp.float32),
        "b2": 0.1 * jax.random.normal(nk(), (1, MLP_SIZES[1]), jnp.float32),
    }
    return params


# ------------------------------- pure-JAX reference ------------------------------------
def reference_forward(params, c_seq, c_cat):
    x = jnp.take(params["emb"], c_seq, axis=0)             # (B, L, C)
    for i, blk in enumerate(params["tcn"]):
        d = 2 ** i
        L = x.shape[1]

        def cconv(inp, w, b):
            out = jnp.zeros(inp.shape[:2] + (w.shape[-1],), jnp.float32)
            for k in range(KERNEL_SIZE):
                shift = (KERNEL_SIZE - 1 - k) * d
                pad = jnp.pad(inp, ((0, 0), (shift, 0), (0, 0)))[:, :L, :]
                out = out + jnp.einsum("blc,cd->bld", pad, w[k])
            return out + b[None]

        h = jax.nn.relu(cconv(x, blk["w1"], blk["b1"]))
        h = jax.nn.relu(cconv(h, blk["w2"], blk["b2"]))
        res = (jnp.einsum("blc,cd->bld", x, blk["wd"]) + blk["bd"][None]) if "wd" in blk else x
        x = jax.nn.relu(h + res)
    pooled = x.mean(axis=1)
    h = jax.nn.relu(pooled @ params["clf"]["w1"] + params["clf"]["b1"])
    return h @ params["clf"]["w2"] + params["clf"]["b2"]


# ------------------------------- main ---------------------------------------------------
if __name__ == "__main__":
    key = jax.random.PRNGKey(0)
    kp, kseq = jax.random.split(key, 2)
    params = init_params(kp)

    # one-time packing of all weights into a single lane-dense slab (hoisted out of forward)
    w_slab, layout, block_meta = pack_params(params)

    c_seq = jax.random.randint(kseq, (B, MAX_LEN), 0, VOCAB, dtype=jnp.int32)
    c_cat = jnp.zeros((B, 1, MAX_LEN), jnp.int32)   # cat_sizes=[] -> only used for batch size

    forward = jax.jit(make_forward(w_slab.shape, layout, block_meta))
    out = jax.block_until_ready(forward(w_slab, c_seq, c_cat))

    ref = reference_forward(params, c_seq, c_cat)
    assert out.shape == (B, MLP_SIZES[-1])
    np.testing.assert_allclose(np.asarray(out), np.asarray(ref), rtol=1e-4, atol=1e-4)
    print("KERNEL_OK")
</pallas_src>

<mosaic_0001>
module attributes {stable_mosaic.version = 11 : i64} {
  func.func @kernel(%arg0: i32, %arg1: memref<32x1xi32, #tpu.memory_space<vmem>>, %arg2: memref<832x128xf32, #tpu.memory_space<vmem>>, %arg3: memref<2x3xf32, #tpu.memory_space<vmem>>) attributes {dimension_semantics = [#tpu.dimension_semantics<arbitrary>], iteration_bounds = array<i64: 1>, scalar_prefetch = 0 : i64, scratch_operands = 0 : i64, tpu.core_type = #tpu.core_type<tc>, window_params = [{pipeline_mode = #tpu.pipeline_mode<synchronous>, transform_indices = @transform_0, window_bounds = array<i64: 32, 1>}, {pipeline_mode = #tpu.pipeline_mode<synchronous>, transform_indices = @transform_1, window_bounds = array<i64: 832, 128>}, {pipeline_mode = #tpu.pipeline_mode<synchronous>, transform_indices = @transform_2, window_bounds = array<i64: 2, 3>}]} {
    %c0 = arith.constant 0 : index
    %c0_0 = arith.constant 0 : index
    %0 = vector.load %arg1[%c0, %c0_0] : memref<32x1xi32, #tpu.memory_space<vmem>>, vector<32x1xi32>
    %1 = tpu.iota {dimensions = array<i32: 1>} : vector<32x64xi32>
    %2 = vector.broadcast %0 : vector<32x1xi32> to vector<32x64xi32>
    %3 = arith.cmpi eq, %1, %2 : vector<32x64xi32>
    %cst = arith.constant 1.000000e+00 : f32
    %cst_1 = arith.constant 0.000000e+00 : f32
    %4 = vector.broadcast %cst : f32 to vector<32x64xf32>
    %5 = vector.broadcast %cst_1 : f32 to vector<32x64xf32>
    %6 = arith.select %3, %4, %5 : vector<32x64xi1>, vector<32x64xf32>
    %c0_2 = arith.constant 0 : index
    %c0_3 = arith.constant 0 : index
    %7 = vector.load %arg2[%c0_2, %c0_3] : memref<832x128xf32, #tpu.memory_space<vmem>>, vector<64x32xf32>
    %cst_4 = arith.constant dense<0.000000e+00> : vector<32x32xf32>
    %8 = tpu.matmul %6, %7, %cst_4 {dimension_numbers = #tpu.dot_dimension_numbers<[1], [0], [0], [1], [0, 0, 1, 1], [], []>} : vector<32x64xf32>, vector<64x32xf32>, vector<32x32xf32> -> vector<32x32xf32>
    %9 = tpu.iota {dimensions = array<i32: 0>} : vector<32x1xi32>
    %c15_i32 = arith.constant 15 : i32
    %10 = vector.broadcast %c15_i32 : i32 to vector<32x1xi32>
    %11 = arith.andi %9, %10 : vector<32x1xi32>
    %c1_i32 = arith.constant 1 : i32
    %12 = vector.broadcast %c1_i32 : i32 to vector<32x1xi32>
    %13 = arith.cmpi sge, %11, %12 : vector<32x1xi32>
    %c64 = arith.constant 64 : index
    %c0_5 = arith.constant 0 : index
    %14 = vector.load %arg2[%c64, %c0_5] : memref<832x128xf32, #tpu.memory_space<vmem>>, vector<32x48xf32>
    %c96 = arith.constant 96 : index
    %c0_6 = arith.constant 0 : index
    %15 = vector.load %arg2[%c96, %c0_6] : memref<832x128xf32, #tpu.memory_space<vmem>>, vector<32x48xf32>
    %c128 = arith.constant 128 : index
    %c0_7 = arith.constant 0 : index
    %16 = vector.load %arg2[%c128, %c0_7] : memref<832x128xf32, #tpu.memory_space<vmem>>, vector<1x48xf32>
    %c136 = arith.constant 136 : index
    %c0_8 = arith.constant 0 : index
    %17 = vector.load %arg2[%c136, %c0_8] : memref<832x128xf32, #tpu.memory_space<vmem>>, vector<48x48xf32>
    %c184 = arith.constant 184 : index
    %c0_9 = arith.constant 0 : index
    %18 = vector.load %arg2[%c184, %c0_9] : memref<832x128xf32, #tpu.memory_space<vmem>>, vector<48x48xf32>
    %c232 = arith.constant 232 : index
    %c0_10 = arith.constant 0 : index
    %19 = vector.load %arg2[%c232, %c0_10] : memref<832x128xf32, #tpu.memory_space<vmem>>, vector<1x48xf32>
    %c1_i32_11 = arith.constant 1 : i32
    %20 = tpu.dynamic_rotate %8 by %c1_i32_11 dim 0 : vector<32x32xf32>, i32 -> vector<32x32xf32>
    %cst_12 = arith.constant 0.000000e+00 : f32
    %21 = vector.shape_cast %13 : vector<32x1xi1> to vector<32x1xi1>
    %22 = vector.broadcast %21 : vector<32x1xi1> to vector<32x32xi1>
    %23 = vector.broadcast %cst_12 : f32 to vector<32x32xf32>
    %24 = arith.select %22, %20, %23 : vector<32x32xi1>, vector<32x32xf32>
    %cst_13 = arith.constant dense<0.000000e+00> : vector<32x48xf32>
    %25 = tpu.matmul %24, %14, %cst_13 {dimension_numbers = #tpu.dot_dimension_numbers<[1], [0], [0], [1], [0, 0, 1, 1], [], []>} : vector<32x32xf32>, vector<32x48xf32>, vector<32x48xf32> -> vector<32x48xf32>
    %cst_14 = arith.constant dense<0.000000e+00> : vector<32x48xf32>
    %26 = tpu.matmul %8, %15, %cst_14 {dimension_numbers = #tpu.dot_dimension_numbers<[1], [0], [0], [1], [0, 0, 1, 1], [], []>} : vector<32x32xf32>, vector<32x48xf32>, vector<32x48xf32> -> vector<32x48xf32>
    %27 = arith.addf %25, %26 : vector<32x48xf32>
    %28 = vector.broadcast %16 : vector<1x48xf32> to vector<32x48xf32>
    %29 = arith.addf %27, %28 : vector<32x48xf32>
    %cst_15 = arith.constant 0.000000e+00 : f32
    %30 = vector.broadcast %cst_15 : f32 to vector<32x48xf32>
    %31 = arith.maximumf %29, %30 : vector<32x48xf32>
    %c1_i32_16 = arith.constant 1 : i32
    %32 = tpu.dynamic_rotate %31 by %c1_i32_16 dim 0 : vector<32x48xf32>, i32 -> vector<32x48xf32>
    %cst_17 = arith.constant 0.000000e+00 : f32
    %33 = vector.shape_cast %13 : vector<32x1xi1> to vector<32x1xi1>
    %34 = vector.broadcast %33 : vector<32x1xi1> to vector<32x48xi1>
    %35 = vector.broadcast %cst_17 : f32 to vector<32x48xf32>
    %36 = arith.select %34, %32, %35 : vector<32x48xi1>, vector<32x48xf32>
    %cst_18 = arith.constant dense<0.000000e+00> : vector<32x48xf32>
    %37 = tpu.matmul %36, %17, %cst_18 {dimension_numbers = #tpu.dot_dimension_numbers<[1], [0], [0], [1], [0, 0, 1, 1], [], []>} : vector<32x48xf32>, vector<48x48xf32>, vector<32x48xf32> -> vector<32x48xf32>
    %cst_19 = arith.constant dense<0.000000e+00> : vector<32x48xf32>
    %38 = tpu.matmul %31, %18, %cst_19 {dimension_numbers = #tpu.dot_dimension_numbers<[1], [0], [0], [1], [0, 0, 1, 1], [], []>} : vector<32x48xf32>, vector<48x48xf32>, vector<32x48xf32> -> vector<32x48xf32>
    %39 = arith.addf %37, %38 : vector<32x48xf32>
    %40 = vector.broadcast %19 : vector<1x48xf32> to vector<32x48xf32>
    %41 = arith.addf %39, %40 : vector<32x48xf32>
    %cst_20 = arith.constant 0.000000e+00 : f32
    %42 = vector.broadcast %cst_20 : f32 to vector<32x48xf32>
    %43 = arith.maximumf %41, %42 : vector<32x48xf32>
    %c240 = arith.constant 240 : index
    %c0_21 = arith.constant 0 : index
    %44 = vector.load %arg2[%c240, %c0_21] : memref<832x128xf32, #tpu.memory_space<vmem>>, vector<32x48xf32>
    %cst_22 = arith.constant dense<0.000000e+00> : vector<32x48xf32>
    %45 = tpu.matmul %8, %44, %cst_22 {dimension_numbers = #tpu.dot_dimension_numbers<[1], [0], [0], [1], [0, 0, 1, 1], [], []>} : vector<32x32xf32>, vector<32x48xf32>, vector<32x48xf32> -> vector<32x48xf32>
    %c272 = arith.constant 272 : index
    %c0_23 = arith.constant 0 : index
    %46 = vector.load %arg2[%c272, %c0_23] : memref<832x128xf32, #tpu.memory_space<vmem>>, vector<1x48xf32>
    %47 = vector.broadcast %46 : vector<1x48xf32> to vector<32x48xf32>
    %48 = arith.addf %45, %47 : vector<32x48xf32>
    %49 = arith.addf %43, %48 : vector<32x48xf32>
    %cst_24 = arith.constant 0.000000e+00 : f32
    %50 = vector.broadcast %cst_24 : f32 to vector<32x48xf32>
    %51 = arith.maximumf %49, %50 : vector<32x48xf32>
    %c2_i32 = arith.constant 2 : i32
    %52 = vector.broadcast %c2_i32 : i32 to vector<32x1xi32>
    %53 = arith.cmpi sge, %11, %52 : vector<32x1xi32>
    %c280 = arith.constant 280 : index
    %c0_25 = arith.constant 0 : index
    %54 = vector.load %arg2[%c280, %c0_25] : memref<832x128xf32, #tpu.memory_space<vmem>>, vector<48x48xf32>
    %c328 = arith.constant 328 : index
    %c0_26 = arith.constant 0 : index
    %55 = vector.load %arg2[%c328, %c0_26] : memref<832x128xf32, #tpu.memory_space<vmem>>, vector<48x48xf32>
    %c376 = arith.constant 376 : index
    %c0_27 = arith.constant 0 : index
    %56 = vector.load %arg2[%c376, %c0_27] : memref<832x128xf32, #tpu.memory_space<vmem>>, vector<1x48xf32>
    %c384 = arith.constant 384 : index
    %c0_28 = arith.constant 0 : index
    %57 = vector.load %arg2[%c384, %c0_28] : memref<832x128xf32, #tpu.memory_space<vmem>>, vector<48x48xf32>
    %c432 = arith.constant 432 : index
    %c0_29 = arith.constant 0 : index
    %58 = vector.load %arg2[%c432, %c0_29] : memref<832x128xf32, #tpu.memory_space<vmem>>, vector<48x48xf32>
    %c480 = arith.constant 480 : index
    %c0_30 = arith.constant 0 : index
    %59 = vector.load %arg2[%c480, %c0_30] : memref<832x128xf32, #tpu.memory_space<vmem>>, vector<1x48xf32>
    %c2_i32_31 = arith.constant 2 : i32
    %60 = tpu.dynamic_rotate %51 by %c2_i32_31 dim 0 : vector<32x48xf32>, i32 -> vector<32x48xf32>
    %cst_32 = arith.constant 0.000000e+00 : f32
    %61 = vector.shape_cast %53 : vector<32x1xi1> to vector<32x1xi1>
    %62 = vector.broadcast %61 : vector<32x1xi1> to vector<32x48xi1>
    %63 = vector.broadcast %cst_32 : f32 to vector<32x48xf32>
    %64 = arith.select %62, %60, %63 : vector<32x48xi1>, vector<32x48xf32>
    %cst_33 = arith.constant dense<0.000000e+00> : vector<32x48xf32>
    %65 = tpu.matmul %64, %54, %cst_33 {dimension_numbers = #tpu.dot_dimension_numbers<[1], [0], [0], [1], [0, 0, 1, 1], [], []>} : vector<32x48xf32>, vector<48x48xf32>, vector<32x48xf32> -> vector<32x48xf32>
    %cst_34 = arith.constant dense<0.000000e+00> : vector<32x48xf32>
    %66 = tpu.matmul %51, %55, %cst_34 {dimension_numbers = #tpu.dot_dimension_numbers<[1], [0], [0], [1], [0, 0, 1, 1], [], []>} : vector<32x48xf32>, vector<48x48xf32>, vector<32x48xf32> -> vector<32x48xf32>
    %67 = arith.addf %65, %66 : vector<32x48xf32>
    %68 = vector.broadcast %56 : vector<1x48xf32> to vector<32x48xf32>
    %69 = arith.addf %67, %68 : vector<32x48xf32>
    %cst_35 = arith.constant 0.000000e+00 : f32
    %70 = vector.broadcast %cst_35 : f32 to vector<32x48xf32>
    %71 = arith.maximumf %69, %70 : vector<32x48xf32>
    %c2_i32_36 = arith.constant 2 : i32
    %72 = tpu.dynamic_rotate %71 by %c2_i32_36 dim 0 : vector<32x48xf32>, i32 -> vector<32x48xf32>
    %cst_37 = arith.constant 0.000000e+00 : f32
    %73 = vector.shape_cast %53 : vector<32x1xi1> to vector<32x1xi1>
    %74 = vector.broadcast %73 : vector<32x1xi1> to vector<32x48xi1>
    %75 = vector.broadcast %cst_37 : f32 to vector<32x48xf32>
    %76 = arith.select %74, %72, %75 : vector<32x48xi1>, vector<32x48xf32>
    %cst_38 = arith.constant dense<0.000000e+00> : vector<32x48xf32>
    %77 = tpu.matmul %76, %57, %cst_38 {dimension_numbers = #tpu.dot_dimension_numbers<[1], [0], [0], [1], [0, 0, 1, 1], [], []>} : vector<32x48xf32>, vector<48x48xf32>, vector<32x48xf32> -> vector<32x48xf32>
    %cst_39 = arith.constant dense<0.000000e+00> : vector<32x48xf32>
    %78 = tpu.matmul %71, %58, %cst_39 {dimension_numbers = #tpu.dot_dimension_numbers<[1], [0], [0], [1], [0, 0, 1, 1], [], []>} : vector<32x48xf32>, vector<48x48xf32>, vector<32x48xf32> -> vector<32x48xf32>
    %79 = arith.addf %77, %78 : vector<32x48xf32>
    %80 = vector.broadcast %59 : vector<1x48xf32> to vector<32x48xf32>
    %81 = arith.addf %79, %80 : vector<32x48xf32>
    %cst_40 = arith.constant 0.000000e+00 : f32
    %82 = vector.broadcast %cst_40 : f32 to vector<32x48xf32>
    %83 = arith.maximumf %81, %82 : vector<32x48xf32>
    %84 = arith.addf %83, %51 : vector<32x48xf32>
    %cst_41 = arith.constant 0.000000e+00 : f32
    %85 = vector.broadcast %cst_41 : f32 to vector<32x48xf32>
    %86 = arith.maximumf %84, %85 : vector<32x48xf32>
    %c4_i32 = arith.constant 4 : i32
    %87 = vector.broadcast %c4_i32 : i32 to vector<32x1xi32>
    %88 = arith.cmpi sge, %11, %87 : vector<32x1xi32>
    %c488 = arith.constant 488 : index
    %c0_42 = arith.constant 0 : index
    %89 = vector.load %arg2[%c488, %c0_42] : memref<832x128xf32, #tpu.memory_space<vmem>>, vector<48x32xf32>
    %c536 = arith.constant 536 : index
    %c0_43 = arith.constant 0 : index
    %90 = vector.load %arg2[%c536, %c0_43] : memref<832x128xf32, #tpu.memory_space<vmem>>, vector<48x32xf32>
    %c584 = arith.constant 584 : index
    %c0_44 = arith.constant 0 : index
    %91 = vector.load %arg2[%c584, %c0_44] : memref<832x128xf32, #tpu.memory_space<vmem>>, vector<1x32xf32>
    %c592 = arith.constant 592 : index
    %c0_45 = arith.constant 0 : index
    %92 = vector.load %arg2[%c592, %c0_45] : memref<832x128xf32, #tpu.memory_space<vmem>>, vector<32x32xf32>
    %c624 = arith.constant 624 : index
    %c0_46 = arith.constant 0 : index
    %93 = vector.load %arg2[%c624, %c0_46] : memref<832x128xf32, #tpu.memory_space<vmem>>, vector<32x32xf32>
    %c656 = arith.constant 656 : index
    %c0_47 = arith.constant 0 : index
    %94 = vector.load %arg2[%c656, %c0_47] : memref<832x128xf32, #tpu.memory_space<vmem>>, vector<1x32xf32>
    %c4_i32_48 = arith.constant 4 : i32
    %95 = tpu.dynamic_rotate %86 by %c4_i32_48 dim 0 : vector<32x48xf32>, i32 -> vector<32x48xf32>
    %cst_49 = arith.constant 0.000000e+00 : f32
    %96 = vector.shape_cast %88 : vector<32x1xi1> to vector<32x1xi1>
    %97 = vector.broadcast %96 : vector<32x1xi1> to vector<32x48xi1>
    %98 = vector.broadcast %cst_49 : f32 to vector<32x48xf32>
    %99 = arith.select %97, %95, %98 : vector<32x48xi1>, vector<32x48xf32>
    %cst_50 = arith.constant dense<0.000000e+00> : vector<32x32xf32>
    %100 = tpu.matmul %99, %89, %cst_50 {dimension_numbers = #tpu.dot_dimension_numbers<[1], [0], [0], [1], [0, 0, 1, 1], [], []>} : vector<32x48xf32>, vector<48x32xf32>, vector<32x32xf32> -> vector<32x32xf32>
    %cst_51 = arith.constant dense<0.000000e+00> : vector<32x32xf32>
    %101 = tpu.matmul %86, %90, %cst_51 {dimension_numbers = #tpu.dot_dimension_numbers<[1], [0], [0], [1], [0, 0, 1, 1], [], []>} : vector<32x48xf32>, vector<48x32xf32>, vector<32x32xf32> -> vector<32x32xf32>
    %102 = arith.addf %100, %101 : vector<32x32xf32>
    %103 = vector.broadcast %91 : vector<1x32xf32> to vector<32x32xf32>
    %104 = arith.addf %102, %103 : vector<32x32xf32>
    %cst_52 = arith.constant 0.000000e+00 : f32
    %105 = vector.broadcast %cst_52 : f32 to vector<32x32xf32>
    %106 = arith.maximumf %104, %105 : vector<32x32xf32>
    %c4_i32_53 = arith.constant 4 : i32
    %107 = tpu.dynamic_rotate %106 by %c4_i32_53 dim 0 : vector<32x32xf32>, i32 -> vector<32x32xf32>
    %cst_54 = arith.constant 0.000000e+00 : f32
    %108 = vector.shape_cast %88 : vector<32x1xi1> to vector<32x1xi1>
    %109 = vector.broadcast %108 : vector<32x1xi1> to vector<32x32xi1>
    %110 = vector.broadcast %cst_54 : f32 to vector<32x32xf32>
    %111 = arith.select %109, %107, %110 : vector<32x32xi1>, vector<32x32xf32>
    %cst_55 = arith.constant dense<0.000000e+00> : vector<32x32xf32>
    %112 = tpu.matmul %111, %92, %cst_55 {dimension_numbers = #tpu.dot_dimension_numbers<[1], [0], [0], [1], [0, 0, 1, 1], [], []>} : vector<32x32xf32>, vector<32x32xf32>, vector<32x32xf32> -> vector<32x32xf32>
    %cst_56 = arith.constant dense<0.000000e+00> : vector<32x32xf32>
    %113 = tpu.matmul %106, %93, %cst_56 {dimension_numbers = #tpu.dot_dimension_numbers<[1], [0], [0], [1], [0, 0, 1, 1], [], []>} : vector<32x32xf32>, vector<32x32xf32>, vector<32x32xf32> -> vector<32x32xf32>
    %114 = arith.addf %112, %113 : vector<32x32xf32>
    %115 = vector.broadcast %94 : vector<1x32xf32> to vector<32x32xf32>
    %116 = arith.addf %114, %115 : vector<32x32xf32>
    %cst_57 = arith.constant 0.000000e+00 : f32
    %117 = vector.broadcast %cst_57 : f32 to vector<32x32xf32>
    %118 = arith.maximumf %116, %117 : vector<32x32xf32>
    %c664 = arith.constant 664 : index
    %c0_58 = arith.constant 0 : index
    %119 = vector.load %arg2[%c664, %c0_58] : memref<832x128xf32, #tpu.memory_space<vmem>>, vector<48x32xf32>
    %cst_59 = arith.constant dense<0.000000e+00> : vector<32x32xf32>
    %120 = tpu.matmul %86, %119, %cst_59 {dimension_numbers = #tpu.dot_dimension_numbers<[1], [0], [0], [1], [0, 0, 1, 1], [], []>} : vector<32x48xf32>, vector<48x32xf32>, vector<32x32xf32> -> vector<32x32xf32>
    %c712 = arith.constant 712 : index
    %c0_60 = arith.constant 0 : index
    %121 = vector.load %arg2[%c712, %c0_60] : memref<832x128xf32, #tpu.memory_space<vmem>>, vector<1x32xf32>
    %122 = vector.broadcast %121 : vector<1x32xf32> to vector<32x32xf32>
    %123 = arith.addf %120, %122 : vector<32x32xf32>
    %124 = arith.addf %118, %123 : vector<32x32xf32>
    %cst_61 = arith.constant 0.000000e+00 : f32
    %125 = vector.broadcast %cst_61 : f32 to vector<32x32xf32>
    %126 = arith.maximumf %124, %125 : vector<32x32xf32>
    %127 = tpu.iota {dimensions = array<i32: 1>} : vector<2x32xi32>
    %c4_i32_62 = arith.constant 4 : i32
    %128 = vector.broadcast %c4_i32_62 : i32 to vector<2x32xi32>
    %129 = arith.shrsi %127, %128 : vector<2x32xi32>
    %130 = tpu.iota {dimensions = array<i32: 0>} : vector<2x32xi32>
    %131 = arith.cmpi eq, %129, %130 : vector<2x32xi32>
    %cst_63 = arith.constant 6.250000e-02 : f32
    %cst_64 = arith.constant 0.000000e+00 : f32
    %132 = vector.broadcast %cst_63 : f32 to vector<2x32xf32>
    %133 = vector.broadcast %cst_64 : f32 to vector<2x32xf32>
    %134 = arith.select %131, %132, %133 : vector<2x32xi1>, vector<2x32xf32>
    %cst_65 = arith.constant dense<0.000000e+00> : vector<2x32xf32>
    %135 = tpu.matmul %134, %126, %cst_65 {dimension_numbers = #tpu.dot_dimension_numbers<[1], [0], [0], [1], [0, 0, 1, 1], [], []>} : vector<2x32xf32>, vector<32x32xf32>, vector<2x32xf32> -> vector<2x32xf32>
    %c720 = arith.constant 720 : index
    %c0_66 = arith.constant 0 : index
    %136 = vector.load %arg2[%c720, %c0_66] : memref<832x128xf32, #tpu.memory_space<vmem>>, vector<32x64xf32>
    %cst_67 = arith.constant dense<0.000000e+00> : vector<2x64xf32>
    %137 = tpu.matmul %135, %136, %cst_67 {dimension_numbers = #tpu.dot_dimension_numbers<[1], [0], [0], [1], [0, 0, 1, 1], [], []>} : vector<2x32xf32>, vector<32x64xf32>, vector<2x64xf32> -> vector<2x64xf32>
    %c752 = arith.constant 752 : index
    %c0_68 = arith.constant 0 : index
    %138 = vector.load %arg2[%c752, %c0_68] : memref<832x128xf32, #tpu.memory_space<vmem>>, vector<1x64xf32>
    %139 = vector.broadcast %138 : vector<1x64xf32> to vector<2x64xf32>
    %140 = arith.addf %137, %139 : vector<2x64xf32>
    %cst_69 = arith.constant 0.000000e+00 : f32
    %141 = vector.broadcast %cst_69 : f32 to vector<2x64xf32>
    %142 = arith.maximumf %140, %141 : vector<2x64xf32>
    %c760 = arith.constant 760 : index
    %c0_70 = arith.constant 0 : index
    %143 = vector.load %arg2[%c760, %c0_70] : memref<832x128xf32, #tpu.memory_space<vmem>>, vector<64x3xf32>
    %cst_71 = arith.constant dense<0.000000e+00> : vector<2x3xf32>
    %144 = tpu.matmul %142, %143, %cst_71 {dimension_numbers = #tpu.dot_dimension_numbers<[1], [0], [0], [1], [0, 0, 1, 1], [], []>} : vector<2x64xf32>, vector<64x3xf32>, vector<2x3xf32> -> vector<2x3xf32>
    %c824 = arith.constant 824 : index
    %c0_72 = arith.constant 0 : index
    %145 = vector.load %arg2[%c824, %c0_72] : memref<832x128xf32, #tpu.memory_space<vmem>>, vector<1x3xf32>
    %146 = vector.broadcast %145 : vector<1x3xf32> to vector<2x3xf32>
    %147 = arith.addf %144, %146 : vector<2x3xf32>
    %c0_73 = arith.constant 0 : index
    %c0_74 = arith.constant 0 : index
    %148 = vector.load %arg3[%c0_73, %c0_74] : memref<2x3xf32, #tpu.memory_space<vmem>>, vector<2x3xf32>
    tpu.vector_store %arg3[%c0_73, %c0_74], %147 {strides = array<i32>} : memref<2x3xf32, #tpu.memory_space<vmem>>, vector<2x3xf32>,
    return
  }
  func.func @transform_0(%arg0: i32) -> (i32, i32) {
    %c0_i32 = arith.constant 0 : i32
    %c0_i32_0 = arith.constant 0 : i32
    %c0_i32_1 = arith.constant 0 : i32
    return %c0_i32, %c0_i32_0 : i32, i32
  }
  func.func @transform_1(%arg0: i32) -> (i32, i32) {
    %c0_i32 = arith.constant 0 : i32
    %c0_i32_0 = arith.constant 0 : i32
    %c0_i32_1 = arith.constant 0 : i32
    return %c0_i32, %c0_i32_0 : i32, i32
  }
  func.func @transform_2(%arg0: i32) -> (i32, i32) {
    %c0_i32 = arith.constant 0 : i32
    %c0_i32_0 = arith.constant 0 : i32
    %c0_i32_1 = arith.constant 0 : i32
    return %c0_i32, %c0_i32_0 : i32, i32
  }
}

</mosaic_0001>

<llo_original>
// kernel: forward.1
$region0: #{forward.1}
  #allocation0 [shape = 'u32[]', space=smem, size = 0x4, offset = 0x4, fixed_abs, tag = 'smem constant byte address 0x4 - core index']
  #allocation1 [shape = 'u32[144,128]{1,0:T(1,128)}', space=vmem, size = 0x12000, scoped, tag = 'internal scratch']
  %s0 = inlined_call_operand.vmem [shape: s32[32,1], index: 0, kind: input, shape index: {}]
  %s1 = inlined_call_operand.hbm [shape: f32[832,128], index: 1, kind: input, shape index: {}]
  %s2 = inlined_call_operand.hbm [shape: f32[2,3], index: 2, kind: output, shape index: {}]
  %s3 = sld [smem:[#allocation0]]
  $region22: #{forward.1} parent=0
    _
  %s5 = ssub.s32 1, %s3
  %s6 = scalar_select 0, %s5, %s3
  $region1: #{forward.1} parent=0
    #allocation2 [shape = 'u8[425984]{0}', space=vmem, size = 0x68000, scoped, tag = 'input window, operand 1, single buffered']
    #allocation3 [shape = 's32[1]{0}', space=sflag, size = 0x4, scoped, tag = 'scoped memory for forward.1']
    #allocation4 [shape = 's32[1]{0}', space=sflag, size = 0x4, scoped, tag = 'scoped memory for forward.1']
    #allocation5 [shape = 'u8[1024]{0}', space=vmem, size = 0x400, scoped, tag = 'output window, operand 0, single buffered']
    %7 = vsyncpa [#allocation3], 0
    %8 = vsyncpa [#allocation4], 0
    // Predicated region
    $region2: #{forward.1} parent=1 // pred_check
      _
    $region3: #{forward.1} parent=1 // pred_check_branch
      %10 = sbr.rel (0) target = $region5
    $region4: #{forward.1} parent=1 // pred_region
      _
    $region5: #{forward.1} parent=1 // pred_fallthru
      _
    // Predicated region
    $region6: #{forward.1} parent=1 // pred_check
      _
    $region7: #{forward.1} parent=1 // pred_check_branch
      %12 = sbr.rel (0) target = $region9
    $region8: #{forward.1} parent=1 // pred_region
      %s14 = ssub.s32 13312, 13312
      %15 = vsyncadd [#allocation3], %s14
      %s16 = sshll.u32 [#allocation2], 4
      %s17 = int_to_ptr.vmem [resolvable:$true] %s16
      %22 = dma.hbm_to_vmem [thread:$0]  %s1, 13312, %s17, [#allocation3], 128, 128, 8
    $region9: #{forward.1} parent=1 // pred_fallthru
      _
    // Predicated region
    $region10: #{forward.1} parent=1 // pred_check
      _
    $region11: #{forward.1} parent=1 // pred_check_branch
      %24 = sbr.rel (0) target = $region13
    $region12: #{forward.1} parent=1 // pred_region
      %25 = dma.done [#allocation3], 13312
    $region13: #{forward.1} parent=1 // pred_fallthru
      _
    %v26 = vld [vmem:[%s0] sm:$0xff]
    %v27 = vld [vmem:[%s0 + $0x8] sm:$0xff]
    %v28 = vld [vmem:[%s0 + $0x10] sm:$0xff]
    %v29 = vld [vmem:[%s0 + $0x18] sm:$0xff]
    %v30 = vlaneseq
    %v31 = vand.u32 %v30, 127
    %32 = vset.pattern.permute.xlu0 0
    %33 = vperm.xlu0 %32, %v26
    %v34 = vpop.permute.xlu0 %33
    %35 = vset.pattern.permute.xlu0 0
    %36 = vperm.xlu0 %35, %v27
    %v37 = vpop.permute.xlu0 %36
    %38 = vset.pattern.permute.xlu0 0
    %39 = vperm.xlu0 %38, %v28
    %v40 = vpop.permute.xlu0 %39
    %41 = vset.pattern.permute.xlu0 0
    %42 = vperm.xlu0 %41, %v29
    %v43 = vpop.permute.xlu0 %42
    %vm44 = vcmp.eq.s32.totalorder %v31, %v34
    %vm45 = vcmp.eq.s32.totalorder %v31, %v37
    %vm46 = vcmp.eq.s32.totalorder %v31, %v40
    %vm47 = vcmp.eq.s32.totalorder %v31, %v43
    %v48 = vsel %vm44, 1.0, 0.0
    %v49 = vsel %vm45, 1.0, 0.0
    %v50 = vsel %vm46, 1.0, 0.0
    %v51 = vsel %vm47, 1.0, 0.0
    %v52 = vld [vmem:[#allocation2] sm:$0xff]
    %v53 = vld [vmem:[#allocation2 + $0x8] sm:$0xff]
    %v54 = vld [vmem:[#allocation2 + $0x10] sm:$0xff]
    %v55 = vld [vmem:[#allocation2 + $0x18] sm:$0xff]
    %v56 = vld [vmem:[#allocation2 + $0x20] sm:$0xff]
    %v57 = vld [vmem:[#allocation2 + $0x28] sm:$0xff]
    %v58 = vld [vmem:[#allocation2 + $0x30] sm:$0xff]
    %v59 = vld [vmem:[#allocation2 + $0x38] sm:$0xff]
    %vm60 = vcmask 523264
    %v62 = vsel %vm60, %v48, 0
    %v65 = vsel %vm60, %v49, 0
    %v68 = vsel %vm60, %v50, 0
    %v71 = vsel %vm60, %v51, 0
    %73 = vmatprep.subr.mxu0 0.0
    %74 = vmatpush1.msra.mxu0 %v52
    %75 = vmatprep.subr.mxu0 0.0
    %76 = vmatpush1.msra.mxu0 %v53
    %77 = vmatprep.subr.mxu0 0.0
    %78 = vmatpush1.msra.mxu0 %v54
    %79 = vmatprep.subr.mxu0 0.0
    %80 = vmatpush1.msra.mxu0 %v55
    %81 = vmatprep.subr.mxu0 0.0
    %82 = vmatpush1.msra.mxu0 %v56
    %83 = vmatprep.subr.mxu0 0.0
    %84 = vmatpush1.msra.mxu0 %v57
    %85 = vmatprep.subr.mxu0 0.0
    %86 = vmatpush1.msra.mxu0 %v58
    %87 = vmatprep.subr.mxu0 0.0
    %88 = vmatpush1.msra.mxu0 %v59
    %89 = vmatprep.subr.mxu0 0.0
    %90 = vmatpush1.msra.mxu0 0.0
    %91 = vmatprep.subr.mxu0 0.0
    %92 = vmatpush1.msra.mxu0 0.0
    %93 = vmatprep.subr.mxu0 0.0
    %94 = vmatpush1.msra.mxu0 0.0
    %95 = vmatprep.subr.mxu0 0.0
    %96 = vmatpush1.msra.mxu0 0.0
    %97 = vmatprep.subr.mxu0 0.0
    %98 = vmatpush1.msra.mxu0 0.0
    %99 = vmatprep.subr.mxu0 0.0
    %100 = vmatpush1.msra.mxu0 0.0
    %101 = vmatprep.subr.mxu0 0.0
    %102 = vmatpush1.msra.mxu0 0.0
    %103 = vmatprep.subr.mxu0 0.0
    %104 = vmatpush1.msra.mxu0 0.0
    %105 = vmatprep.subr.mxu0 0.0
    %106 = vmatpush1.msra.mxu0 0.0
    %107 = vmatprep.subr.mxu0 0.0
    %108 = vmatpush1.msra.mxu0 0.0
    %109 = vmatprep.subr.mxu0 0.0
    %110 = vmatpush1.msra.mxu0 0.0
    %111 = vmatprep.subr.mxu0 0.0
    %112 = vmatpush1.msra.mxu0 0.0
    %113 = vmatprep.subr.mxu0 0.0
    %114 = vmatpush1.msra.mxu0 0.0
    %115 = vmatprep.subr.mxu0 0.0
    %116 = vmatpush1.msra.mxu0 0.0
    %117 = vmatprep.subr.mxu0 0.0
    %118 = vmatpush1.msra.mxu0 0.0
    %119 = vmatprep.subr.mxu0 0.0
    %120 = vmatpush1.msra.mxu0 0.0
    %121 = vmatprep.subr.mxu0 0.0
    %122 = vmatpush1.msra.mxu0 0.0
    %123 = vmatprep.subr.mxu0 0.0
    %124 = vmatpush1.msra.mxu0 0.0
    %125 = vmatprep.subr.mxu0 0.0
    %126 = vmatpush1.msra.mxu0 0.0
    %127 = vmatprep.subr.mxu0 0.0
    %128 = vmatpush1.msra.mxu0 0.0
    %129 = vmatprep.subr.mxu0 0.0
    %130 = vmatpush1.msra.mxu0 0.0
    %131 = vmatprep.subr.mxu0 0.0
    %132 = vmatpush1.msra.mxu0 0.0
    %133 = vmatprep.subr.mxu0 0.0
    %134 = vmatpush1.msra.mxu0 0.0
    %135 = vmatprep.subr.mxu0 0.0
    %136 = vmatpush1.msra.mxu0 0.0
    %137 = vmatprep.mubr.f32.mxu0 0.0
    %138 = vmatmul.mubr.f32.gmra.mrb[0].mxu0 %v62
    %v139 = vpop.f32.mrb[0].mxu0
    %v140 = vadd.f32 0.0, %v139
    %v141 = vpop.f32.mrb[0].mxu0
    %142 = vmatprep.mubr.f32.mxu0 0.0
    %143 = vmatmul.mubr.f32.gmra.mrb[0].mxu0 %v65
    %v144 = vpop.f32.mrb[0].mxu0
    %v145 = vadd.f32 0.0, %v144
    %v146 = vpop.f32.mrb[0].mxu0
    %147 = vmatprep.mubr.f32.mxu0 0.0
    %148 = vmatmul.mubr.f32.gmra.mrb[0].mxu0 %v68
    %v149 = vpop.f32.mrb[0].mxu0
    %v150 = vadd.f32 0.0, %v149
    %v151 = vpop.f32.mrb[0].mxu0
    %152 = vmatprep.mubr.f32.mxu0 0.0
    %153 = vmatmul.mubr.f32.gmra.mrb[0].mxu0 %v71
    %v154 = vpop.f32.mrb[0].mxu0
    %v155 = vadd.f32 0.0, %v154
    %v156 = vpop.f32.mrb[0].mxu0
    %157 = vdwg.mxu0
    %v158 = vlaneseq
    %v159 = vshrl.u32 %v158, 7
    %v160 = vadd.s32 %v159, 8
    %v161 = vadd.s32 %v159, 16
    %v162 = vadd.s32 %v159, 24
    %v163 = vand.u32 %v159, 15
    %v164 = vand.u32 %v160, 15
    %v165 = vand.u32 %v161, 15
    %v166 = vand.u32 %v162, 15
    %vm167 = vcmp.ge.s32.totalorder %v163, 1
    %vm168 = vcmp.ge.s32.totalorder %v164, 1
    %vm169 = vcmp.ge.s32.totalorder %v165, 1
    %vm170 = vcmp.ge.s32.totalorder %v166, 1
    %v171 = vld [vmem:[#allocation2 + $0x40] sm:$0xff]
    %v172 = vld [vmem:[#allocation2 + $0x48] sm:$0xff]
    %v173 = vld [vmem:[#allocation2 + $0x50] sm:$0xff]
    %v174 = vld [vmem:[#allocation2 + $0x58] sm:$0xff]
    %v175 = vld [vmem:[#allocation2 + $0x60] sm:$0xff]
    %v176 = vld [vmem:[#allocation2 + $0x68] sm:$0xff]
    %v177 = vld [vmem:[#allocation2 + $0x70] sm:$0xff]
    %v178 = vld [vmem:[#allocation2 + $0x78] sm:$0xff]
    %v179 = vld [vmem:[#allocation2 + $0x80] sm:$0x1]
    %v180 = vld [vmem:[#allocation2 + $0x88] sm:$0xff]
    %v181 = vld [vmem:[#allocation2 + $0x90] sm:$0xff]
    %v182 = vld [vmem:[#allocation2 + $0x98] sm:$0xff]
    %v183 = vld [vmem:[#allocation2 + $0xa0] sm:$0xff]
    %v184 = vld [vmem:[#allocation2 + $0xa8] sm:$0xff]
    %v185 = vld [vmem:[#allocation2 + $0xb0] sm:$0xff]
    %v186 = vld [vmem:[#allocation2 + $0xb8] sm:$0xff]
    %v187 = vld [vmem:[#allocation2 + $0xc0] sm:$0xff]
    %v188 = vld [vmem:[#allocation2 + $0xc8] sm:$0xff]
    %v189 = vld [vmem:[#allocation2 + $0xd0] sm:$0xff]
    %v190 = vld [vmem:[#allocation2 + $0xd8] sm:$0xff]
    %v191 = vld [vmem:[#allocation2 + $0xe0] sm:$0xff]
    %v192 = vld [vmem:[#allocation2 + $0xe8] sm:$0x1]
    %v193 = vrot.slane %v140, 7
    %v194 = vrot.slane %v145, 7
    %v195 = vrot.slane %v150, 7
    %v196 = vrot.slane %v155, 7
    %vm197 = vcmp.lt.s32.totalorder %v159, 1
    %v198 = vsel %vm197, %v195, %v196
    %v199 = vsel %vm197, %v194, %v195
    %v200 = vsel %vm197, %v193, %v194
    %v201 = vsel %vm197, %v196, %v193
    %v202 = vsel %vm167, 1, 0
    %v203 = vsel %vm168, 1, 0
    %v204 = vsel %vm169, 1, 0
    %v205 = vsel %vm170, 1, 0
    %vm206 = vcmp.eq.s32.totalorder %v202, 1
    %vm207 = vcmp.eq.s32.totalorder %v203, 1
    %vm208 = vcmp.eq.s32.totalorder %v204, 1
    %vm209 = vcmp.eq.s32.totalorder %v205, 1
    %v210 = vsel %vm206, %v201, 0.0
    %v211 = vsel %vm207, %v200, 0.0
    %v212 = vsel %vm208, %v199, 0.0
    %v213 = vsel %vm209, %v198, 0.0
    %vm214 = vcmask 261120
    %v216 = vsel %vm214, %v140, 0
    %v219 = vsel %vm214, %v145, 0
    %v222 = vsel %vm214, %v150, 0
    %v225 = vsel %vm214, %v155, 0
    %227 = vmatprep.subr.mxu0 0.0
    %228 = vmatpush1.msra.mxu0 %v175
    %229 = vmatprep.subr.mxu0 0.0
    %230 = vmatpush1.msra.mxu0 %v176
    %231 = vmatprep.subr.mxu0 0.0
    %232 = vmatpush1.msra.mxu0 %v177
    %233 = vmatprep.subr.mxu0 0.0
    %234 = vmatpush1.msra.mxu0 %v178
    %235 = vmatprep.subr.mxu0 0.0
    %236 = vmatpush1.msra.mxu0 0.0
    %237 = vmatprep.subr.mxu0 0.0
    %238 = vmatpush1.msra.mxu0 0.0
    %239 = vmatprep.subr.mxu0 0.0
    %240 = vmatpush1.msra.mxu0 0.0
    %241 = vmatprep.subr.mxu0 0.0
    %242 = vmatpush1.msra.mxu0 0.0
    %243 = vmatprep.subr.mxu0 0.0
    %244 = vmatpush1.msra.mxu0 0.0
    %245 = vmatprep.subr.mxu0 0.0
    %246 = vmatpush1.msra.mxu0 0.0
    %247 = vmatprep.subr.mxu0 0.0
    %248 = vmatpush1.msra.mxu0 0.0
    %249 = vmatprep.subr.mxu0 0.0
    %250 = vmatpush1.msra.mxu0 0.0
    %251 = vmatprep.subr.mxu0 0.0
    %252 = vmatpush1.msra.mxu0 0.0
    %253 = vmatprep.subr.mxu0 0.0
    %254 = vmatpush1.msra.mxu0 0.0
    %255 = vmatprep.subr.mxu0 0.0
    %256 = vmatpush1.msra.mxu0 0.0
    %257 = vmatprep.subr.mxu0 0.0
    %258 = vmatpush1.msra.mxu0 0.0
    %259 = vmatprep.subr.mxu0 0.0
    %260 = vmatpush1.msra.mxu0 0.0
    %261 = vmatprep.subr.mxu0 0.0
    %262 = vmatpush1.msra.mxu0 0.0
    %263 = vmatprep.subr.mxu0 0.0
    %264 = vmatpush1.msra.mxu0 0.0
    %265 = vmatprep.subr.mxu0 0.0
    %266 = vmatpush1.msra.mxu0 0.0
    %267 = vmatprep.subr.mxu0 0.0
    %268 = vmatpush1.msra.mxu0 0.0
    %269 = vmatprep.subr.mxu0 0.0
    %270 = vmatpush1.msra.mxu0 0.0
    %271 = vmatprep.subr.mxu0 0.0
    %272 = vmatpush1.msra.mxu0 0.0
    %273 = vmatprep.subr.mxu0 0.0
    %274 = vmatpush1.msra.mxu0 0.0
    %275 = vmatprep.subr.mxu0 0.0
    %276 = vmatpush1.msra.mxu0 0.0
    %277 = vmatprep.subr.mxu0 0.0
    %278 = vmatpush1.msra.mxu0 0.0
    %279 = vmatprep.subr.mxu0 0.0
    %280 = vmatpush1.msra.mxu0 0.0
    %281 = vmatprep.subr.mxu0 0.0
    %282 = vmatpush1.msra.mxu0 0.0
    %283 = vmatprep.subr.mxu0 0.0
    %284 = vmatpush1.msra.mxu0 0.0
    %285 = vmatprep.subr.mxu0 0.0
    %286 = vmatpush1.msra.mxu0 0.0
    %287 = vmatprep.subr.mxu0 0.0
    %288 = vmatpush1.msra.mxu0 0.0
    %289 = vmatprep.subr.mxu0 0.0
    %290 = vmatpush1.msra.mxu0 0.0
    %291 = vmatprep.mubr.f32.mxu0 0.0
    %292 = vmatmul.mubr.f32.gmra.mrb[0].mxu0 %v216
    %v293 = vpop.f32.mrb[0].mxu0
    %v294 = vadd.f32 0.0, %v293
    %v295 = vpop.f32.mrb[0].mxu0
    %296 = vmatprep.mubr.f32.mxu0 0.0
    %297 = vmatmul.mubr.f32.gmra.mrb[0].mxu0 %v219
    %v298 = vpop.f32.mrb[0].mxu0
    %v299 = vadd.f32 0.0, %v298
    %v300 = vpop.f32.mrb[0].mxu0
    %301 = vmatprep.mubr.f32.mxu0 0.0
    %302 = vmatmul.mubr.f32.gmra.mrb[0].mxu0 %v222
    %v303 = vpop.f32.mrb[0].mxu0
    %v304 = vadd.f32 0.0, %v303
    %v305 = vpop.f32.mrb[0].mxu0
    %306 = vmatprep.mubr.f32.mxu0 0.0
    %307 = vmatmul.mubr.f32.gmra.mrb[0].mxu0 %v225
    %v308 = vpop.f32.mrb[0].mxu0
    %v309 = vadd.f32 0.0, %v308
    %v310 = vpop.f32.mrb[0].mxu0
    %311 = vdwg.mxu0
    %v313 = vsel %vm214, %v210, 0
    %v316 = vsel %vm214, %v211, 0
    %v319 = vsel %vm214, %v212, 0
    %v322 = vsel %vm214, %v213, 0
    %324 = vmatprep.subr.mxu0 0.0
    %325 = vmatpush1.msra.mxu0 %v171
    %326 = vmatprep.subr.mxu0 0.0
    %327 = vmatpush1.msra.mxu0 %v172
    %328 = vmatprep.subr.mxu0 0.0
    %329 = vmatpush1.msra.mxu0 %v173
    %330 = vmatprep.subr.mxu0 0.0
    %331 = vmatpush1.msra.mxu0 %v174
    %332 = vmatprep.subr.mxu0 0.0
    %333 = vmatpush1.msra.mxu0 0.0
    %334 = vmatprep.subr.mxu0 0.0
    %335 = vmatpush1.msra.mxu0 0.0
    %336 = vmatprep.subr.mxu0 0.0
    %337 = vmatpush1.msra.mxu0 0.0
    %338 = vmatprep.subr.mxu0 0.0
    %339 = vmatpush1.msra.mxu0 0.0
    %340 = vmatprep.subr.mxu0 0.0
    %341 = vmatpush1.msra.mxu0 0.0
    %342 = vmatprep.subr.mxu0 0.0
    %343 = vmatpush1.msra.mxu0 0.0
    %344 = vmatprep.subr.mxu0 0.0
    %345 = vmatpush1.msra.mxu0 0.0
    %346 = vmatprep.subr.mxu0 0.0
    %347 = vmatpush1.msra.mxu0 0.0
    %348 = vmatprep.subr.mxu0 0.0
    %349 = vmatpush1.msra.mxu0 0.0
    %350 = vmatprep.subr.mxu0 0.0
    %351 = vmatpush1.msra.mxu0 0.0
    %352 = vmatprep.subr.mxu0 0.0
    %353 = vmatpush1.msra.mxu0 0.0
    %354 = vmatprep.subr.mxu0 0.0
    %355 = vmatpush1.msra.mxu0 0.0
    %356 = vmatprep.subr.mxu0 0.0
    %357 = vmatpush1.msra.mxu0 0.0
    %358 = vmatprep.subr.mxu0 0.0
    %359 = vmatpush1.msra.mxu0 0.0
    %360 = vmatprep.subr.mxu0 0.0
    %361 = vmatpush1.msra.mxu0 0.0
    %362 = vmatprep.subr.mxu0 0.0
    %363 = vmatpush1.msra.mxu0 0.0
    %364 = vmatprep.subr.mxu0 0.0
    %365 = vmatpush1.msra.mxu0 0.0
    %366 = vmatprep.subr.mxu0 0.0
    %367 = vmatpush1.msra.mxu0 0.0
    %368 = vmatprep.subr.mxu0 0.0
    %369 = vmatpush1.msra.mxu0 0.0
    %370 = vmatprep.subr.mxu0 0.0
    %371 = vmatpush1.msra.mxu0 0.0
    %372 = vmatprep.subr.mxu0 0.0
    %373 = vmatpush1.msra.mxu0 0.0
    %374 = vmatprep.subr.mxu0 0.0
    %375 = vmatpush1.msra.mxu0 0.0
    %376 = vmatprep.subr.mxu0 0.0
    %377 = vmatpush1.msra.mxu0 0.0
    %378 = vmatprep.subr.mxu0 0.0
    %379 = vmatpush1.msra.mxu0 0.0
    %380 = vmatprep.subr.mxu0 0.0
    %381 = vmatpush1.msra.mxu0 0.0
    %382 = vmatprep.subr.mxu0 0.0
    %383 = vmatpush1.msra.mxu0 0.0
    %384 = vmatprep.subr.mxu0 0.0
    %385 = vmatpush1.msra.mxu0 0.0
    %386 = vmatprep.subr.mxu0 0.0
    %387 = vmatpush1.msra.mxu0 0.0
    %388 = vmatprep.mubr.f32.mxu0 0.0
    %389 = vmatmul.mubr.f32.gmra.mrb[0].mxu0 %v313
    %v390 = vpop.f32.mrb[0].mxu0
    %v391 = vadd.f32 %v294, %v390
    %v392 = vpop.f32.mrb[0].mxu0
    %393 = vmatprep.mubr.f32.mxu0 0.0
    %394 = vmatmul.mubr.f32.gmra.mrb[0].mxu0 %v316
    %v395 = vpop.f32.mrb[0].mxu0
    %v396 = vadd.f32 %v299, %v395
    %v397 = vpop.f32.mrb[0].mxu0
    %398 = vmatprep.mubr.f32.mxu0 0.0
    %399 = vmatmul.mubr.f32.gmra.mrb[0].mxu0 %v319
    %v400 = vpop.f32.mrb[0].mxu0
    %v401 = vadd.f32 %v304, %v400
    %v402 = vpop.f32.mrb[0].mxu0
    %403 = vmatprep.mubr.f32.mxu0 0.0
    %404 = vmatmul.mubr.f32.gmra.mrb[0].mxu0 %v322
    %v405 = vpop.f32.mrb[0].mxu0
    %v406 = vadd.f32 %v309, %v405
    %v407 = vpop.f32.mrb[0].mxu0
    %408 = vdwg.mxu0
    %v409 = vlaneseq
    %v410 = vshrl.u32 %v409, 7
    %v411 = vsub.s32 0, %v410
    %v412 = vrot.slane %v179, %v411
    %v413 = vadd.f32 %v391, %v412
    %v414 = vadd.f32 %v396, %v412
    %v415 = vadd.f32 %v401, %v412
    %v416 = vadd.f32 %v406, %v412
    %v417 = vmax.f32 %v413, 0.0
    %v418 = vmax.f32 %v414, 0.0
    %v419 = vmax.f32 %v415, 0.0
    %v420 = vmax.f32 %v416, 0.0
    %v421 = vrot.slane %v417, 7
    %v422 = vrot.slane %v418, 7
    %v423 = vrot.slane %v419, 7
    %v424 = vrot.slane %v420, 7
    %v425 = vsel %vm197, %v423, %v424
    %v426 = vsel %vm197, %v422, %v423
    %v427 = vsel %vm197, %v421, %v422
    %v428 = vsel %vm197, %v424, %v421
    %v429 = vsel %vm206, %v428, 0.0
    %v430 = vsel %vm207, %v427, 0.0
    %v431 = vsel %vm208, %v426, 0.0
    %v432 = vsel %vm209, %v425, 0.0
    %vm433 = vcmask 392192
    %v435 = vsel %vm433, %v417, 0
    %v438 = vsel %vm433, %v418, 0
    %v441 = vsel %vm433, %v419, 0
    %v444 = vsel %vm433, %v420, 0
    %446 = vmatprep.subr.mxu0 0.0
    %447 = vmatpush1.msra.mxu0 %v186
    %448 = vmatprep.subr.mxu0 0.0
    %449 = vmatpush1.msra.mxu0 %v187
    %450 = vmatprep.subr.mxu0 0.0
    %451 = vmatpush1.msra.mxu0 %v188
    %452 = vmatprep.subr.mxu0 0.0
    %453 = vmatpush1.msra.mxu0 %v189
    %454 = vmatprep.subr.mxu0 0.0
    %455 = vmatpush1.msra.mxu0 %v190
    %456 = vmatprep.subr.mxu0 0.0
    %457 = vmatpush1.msra.mxu0 %v191
    %458 = vmatprep.subr.mxu0 0.0
    %459 = vmatpush1.msra.mxu0 0.0
    %460 = vmatprep.subr.mxu0 0.0
    %461 = vmatpush1.msra.mxu0 0.0
    %462 = vmatprep.subr.mxu0 0.0
    %463 = vmatpush1.msra.mxu0 0.0
    %464 = vmatprep.subr.mxu0 0.0
    %465 = vmatpush1.msra.mxu0 0.0
    %466 = vmatprep.subr.mxu0 0.0
    %467 = vmatpush1.msra.mxu0 0.0
    %468 = vmatprep.subr.mxu0 0.0
    %469 = vmatpush1.msra.mxu0 0.0
    %470 = vmatprep.subr.mxu0 0.0
    %471 = vmatpush1.msra.mxu0 0.0
    %472 = vmatprep.subr.mxu0 0.0
    %473 = vmatpush1.msra.mxu0 0.0
    %474 = vmatprep.subr.mxu0 0.0
    %475 = vmatpush1.msra.mxu0 0.0
    %476 = vmatprep.subr.mxu0 0.0
    %477 = vmatpush1.msra.mxu0 0.0
    %478 = vmatprep.subr.mxu0 0.0
    %479 = vmatpush1.msra.mxu0 0.0
    %480 = vmatprep.subr.mxu0 0.0
    %481 = vmatpush1.msra.mxu0 0.0
    %482 = vmatprep.subr.mxu0 0.0
    %483 = vmatpush1.msra.mxu0 0.0
    %484 = vmatprep.subr.mxu0 0.0
    %485 = vmatpush1.msra.mxu0 0.0
    %486 = vmatprep.subr.mxu0 0.0
    %487 = vmatpush1.msra.mxu0 0.0
    %488 = vmatprep.subr.mxu0 0.0
    %489 = vmatpush1.msra.mxu0 0.0
    %490 = vmatprep.subr.mxu0 0.0
    %491 = vmatpush1.msra.mxu0 0.0
    %492 = vmatprep.subr.mxu0 0.0
    %493 = vmatpush1.msra.mxu0 0.0
    %494 = vmatprep.subr.mxu0 0.0
    %495 = vmatpush1.msra.mxu0 0.0
    %496 = vmatprep.subr.mxu0 0.0
    %497 = vmatpush1.msra.mxu0 0.0
    %498 = vmatprep.subr.mxu0 0.0
    %499 = vmatpush1.msra.mxu0 0.0
    %500 = vmatprep.subr.mxu0 0.0
    %501 = vmatpush1.msra.mxu0 0.0
    %502 = vmatprep.subr.mxu0 0.0
    %503 = vmatpush1.msra.mxu0 0.0
    %504 = vmatprep.subr.mxu0 0.0
    %505 = vmatpush1.msra.mxu0 0.0
    %506 = vmatprep.subr.mxu0 0.0
    %507 = vmatpush1.msra.mxu0 0.0
    %508 = vmatprep.subr.mxu0 0.0
    %509 = vmatpush1.msra.mxu0 0.0
    %510 = vmatprep.mubr.f32.mxu0 0.0
    %511 = vmatmul.mubr.f32.gmra.mrb[0].mxu0 %v435
    %v512 = vpop.f32.mrb[0].mxu0
    %v513 = vadd.f32 0.0, %v512
    %v514 = vpop.f32.mrb[0].mxu0
    %515 = vmatprep.mubr.f32.mxu0 0.0
    %516 = vmatmul.mubr.f32.gmra.mrb[0].mxu0 %v438
    %v517 = vpop.f32.mrb[0].mxu0
    %v518 = vadd.f32 0.0, %v517
    %v519 = vpop.f32.mrb[0].mxu0
    %520 = vmatprep.mubr.f32.mxu0 0.0
    %521 = vmatmul.mubr.f32.gmra.mrb[0].mxu0 %v441
    %v522 = vpop.f32.mrb[0].mxu0
    %v523 = vadd.f32 0.0, %v522
    %v524 = vpop.f32.mrb[0].mxu0
    %525 = vmatprep.mubr.f32.mxu0 0.0
    %526 = vmatmul.mubr.f32.gmra.mrb[0].mxu0 %v444
    %v527 = vpop.f32.mrb[0].mxu0
    %v528 = vadd.f32 0.0, %v527
    %v529 = vpop.f32.mrb[0].mxu0
    %530 = vdwg.mxu0
    %v532 = vsel %vm433, %v429, 0
    %v535 = vsel %vm433, %v430, 0
    %v538 = vsel %vm433, %v431, 0
    %v541 = vsel %vm433, %v432, 0
    %543 = vmatprep.subr.mxu0 0.0
    %544 = vmatpush1.msra.mxu0 %v180
    %545 = vmatprep.subr.mxu0 0.0
    %546 = vmatpush1.msra.mxu0 %v181
    %547 = vmatprep.subr.mxu0 0.0
    %548 = vmatpush1.msra.mxu0 %v182
    %549 = vmatprep.subr.mxu0 0.0
    %550 = vmatpush1.msra.mxu0 %v183
    %551 = vmatprep.subr.mxu0 0.0
    %552 = vmatpush1.msra.mxu0 %v184
    %553 = vmatprep.subr.mxu0 0.0
    %554 = vmatpush1.msra.mxu0 %v185
    %555 = vmatprep.subr.mxu0 0.0
    %556 = vmatpush1.msra.mxu0 0.0
    %557 = vmatprep.subr.mxu0 0.0
    %558 = vmatpush1.msra.mxu0 0.0
    %559 = vmatprep.subr.mxu0 0.0
    %560 = vmatpush1.msra.mxu0 0.0
    %561 = vmatprep.subr.mxu0 0.0
    %562 = vmatpush1.msra.mxu0 0.0
    %563 = vmatprep.subr.mxu0 0.0
    %564 = vmatpush1.msra.mxu0 0.0
    %565 = vmatprep.subr.mxu0 0.0
    %566 = vmatpush1.msra.mxu0 0.0
    %567 = vmatprep.subr.mxu0 0.0
    %568 = vmatpush1.msra.mxu0 0.0
    %569 = vmatprep.subr.mxu0 0.0
    %570 = vmatpush1.msra.mxu0 0.0
    %571 = vmatprep.subr.mxu0 0.0
    %572 = vmatpush1.msra.mxu0 0.0
    %573 = vmatprep.subr.mxu0 0.0
    %574 = vmatpush1.msra.mxu0 0.0
    %575 = vmatprep.subr.mxu0 0.0
    %576 = vmatpush1.msra.mxu0 0.0
    %577 = vmatprep.subr.mxu0 0.0
    %578 = vmatpush1.msra.mxu0 0.0
    %579 = vmatprep.subr.mxu0 0.0
    %580 = vmatpush1.msra.mxu0 0.0
    %581 = vmatprep.subr.mxu0 0.0
    %582 = vmatpush1.msra.mxu0 0.0
    %583 = vmatprep.subr.mxu0 0.0
    %584 = vmatpush1.msra.mxu0 0.0
    %585 = vmatprep.subr.mxu0 0.0
    %586 = vmatpush1.msra.mxu0 0.0
    %587 = vmatprep.subr.mxu0 0.0
    %588 = vmatpush1.msra.mxu0 0.0
    %589 = vmatprep.subr.mxu0 0.0
    %590 = vmatpush1.msra.mxu0 0.0
    %591 = vmatprep.subr.mxu0 0.0
    %592 = vmatpush1.msra.mxu0 0.0
    %593 = vmatprep.subr.mxu0 0.0
    %594 = vmatpush1.msra.mxu0 0.0
    %595 = vmatprep.subr.mxu0 0.0
    %596 = vmatpush1.msra.mxu0 0.0
    %597 = vmatprep.subr.mxu0 0.0
    %598 = vmatpush1.msra.mxu0 0.0
    %599 = vmatprep.subr.mxu0 0.0
    %600 = vmatpush1.msra.mxu0 0.0
    %601 = vmatprep.subr.mxu0 0.0
    %602 = vmatpush1.msra.mxu0 0.0
    %603 = vmatprep.subr.mxu0 0.0
    %604 = vmatpush1.msra.mxu0 0.0
    %605 = vmatprep.subr.mxu0 0.0
    %606 = vmatpush1.msra.mxu0 0.0
    %607 = vmatprep.mubr.f32.mxu0 0.0
    %608 = vmatmul.mubr.f32.gmra.mrb[0].mxu0 %v532
    %v609 = vpop.f32.mrb[0].mxu0
    %v610 = vadd.f32 %v513, %v609
    %v611 = vpop.f32.mrb[0].mxu0
    %612 = vmatprep.mubr.f32.mxu0 0.0
    %613 = vmatmul.mubr.f32.gmra.mrb[0].mxu0 %v535
    %v614 = vpop.f32.mrb[0].mxu0
    %v615 = vadd.f32 %v518, %v614
    %v616 = vpop.f32.mrb[0].mxu0
    %617 = vmatprep.mubr.f32.mxu0 0.0
    %618 = vmatmul.mubr.f32.gmra.mrb[0].mxu0 %v538
    %v619 = vpop.f32.mrb[0].mxu0
    %v620 = vadd.f32 %v523, %v619
    %v621 = vpop.f32.mrb[0].mxu0
    %622 = vmatprep.mubr.f32.mxu0 0.0
    %623 = vmatmul.mubr.f32.gmra.mrb[0].mxu0 %v541
    %v624 = vpop.f32.mrb[0].mxu0
    %v625 = vadd.f32 %v528, %v624
    %v626 = vpop.f32.mrb[0].mxu0
    %627 = vdwg.mxu0
    %v628 = vlaneseq
    %v629 = vshrl.u32 %v628, 7
    %v630 = vsub.s32 0, %v629
    %v631 = vrot.slane %v192, %v630
    %v632 = vadd.f32 %v610, %v631
    %v633 = vadd.f32 %v615, %v631
    %v634 = vadd.f32 %v620, %v631
    %v635 = vadd.f32 %v625, %v631
    %v636 = vmax.f32 %v632, 0.0
    %v637 = vmax.f32 %v633, 0.0
    %v638 = vmax.f32 %v634, 0.0
    %v639 = vmax.f32 %v635, 0.0
    %v640 = vld [vmem:[#allocation2 + $0xf0] sm:$0xff]
    %v641 = vld [vmem:[#allocation2 + $0xf8] sm:$0xff]
    %v642 = vld [vmem:[#allocation2 + $0x100] sm:$0xff]
    %v643 = vld [vmem:[#allocation2 + $0x108] sm:$0xff]
    %v644 = vld [vmem:[#allocation2 + $0x110] sm:$0x1]
    %v645 = vlaneseq
    %v646 = vshrl.u32 %v645, 7
    %v647 = vsub.s32 0, %v646
    %v648 = vrot.slane %v644, %v647
    %649 = vmatprep.subr.mxu0 0.0
    %650 = vmatpush1.msra.mxu0 %v640
    %651 = vmatprep.subr.mxu0 0.0
    %652 = vmatpush1.msra.mxu0 %v641
    %653 = vmatprep.subr.mxu0 0.0
    %654 = vmatpush1.msra.mxu0 %v642
    %655 = vmatprep.subr.mxu0 0.0
    %656 = vmatpush1.msra.mxu0 %v643
    %657 = vmatprep.subr.mxu0 0.0
    %658 = vmatpush1.msra.mxu0 0.0
    %659 = vmatprep.subr.mxu0 0.0
    %660 = vmatpush1.msra.mxu0 0.0
    %661 = vmatprep.subr.mxu0 0.0
    %662 = vmatpush1.msra.mxu0 0.0
    %663 = vmatprep.subr.mxu0 0.0
    %664 = vmatpush1.msra.mxu0 0.0
    %665 = vmatprep.subr.mxu0 0.0
    %666 = vmatpush1.msra.mxu0 0.0
    %667 = vmatprep.subr.mxu0 0.0
    %668 = vmatpush1.msra.mxu0 0.0
    %669 = vmatprep.subr.mxu0 0.0
    %670 = vmatpush1.msra.mxu0 0.0
    %671 = vmatprep.subr.mxu0 0.0
    %672 = vmatpush1.msra.mxu0 0.0
    %673 = vmatprep.subr.mxu0 0.0
    %674 = vmatpush1.msra.mxu0 0.0
    %675 = vmatprep.subr.mxu0 0.0
    %676 = vmatpush1.msra.mxu0 0.0
    %677 = vmatprep.subr.mxu0 0.0
    %678 = vmatpush1.msra.mxu0 0.0
    %679 = vmatprep.subr.mxu0 0.0
    %680 = vmatpush1.msra.mxu0 0.0
    %681 = vmatprep.subr.mxu0 0.0
    %682 = vmatpush1.msra.mxu0 0.0
    %683 = vmatprep.subr.mxu0 0.0
    %684 = vmatpush1.msra.mxu0 0.0
    %685 = vmatprep.subr.mxu0 0.0
    %686 = vmatpush1.msra.mxu0 0.0
    %687 = vmatprep.subr.mxu0 0.0
    %688 = vmatpush1.msra.mxu0 0.0
    %689 = vmatprep.subr.mxu0 0.0
    %690 = vmatpush1.msra.mxu0 0.0
    %691 = vmatprep.subr.mxu0 0.0
    %692 = vmatpush1.msra.mxu0 0.0
    %693 = vmatprep.subr.mxu0 0.0
    %694 = vmatpush1.msra.mxu0 0.0
    %695 = vmatprep.subr.mxu0 0.0
    %696 = vmatpush1.msra.mxu0 0.0
    %697 = vmatprep.subr.mxu0 0.0
    %698 = vmatpush1.msra.mxu0 0.0
    %699 = vmatprep.subr.mxu0 0.0
    %700 = vmatpush1.msra.mxu0 0.0
    %701 = vmatprep.subr.mxu0 0.0
    %702 = vmatpush1.msra.mxu0 0.0
    %703 = vmatprep.subr.mxu0 0.0
    %704 = vmatpush1.msra.mxu0 0.0
    %705 = vmatprep.subr.mxu0 0.0
    %706 = vmatpush1.msra.mxu0 0.0
    %707 = vmatprep.subr.mxu0 0.0
    %708 = vmatpush1.msra.mxu0 0.0
    %709 = vmatprep.subr.mxu0 0.0
    %710 = vmatpush1.msra.mxu0 0.0
    %711 = vmatprep.subr.mxu0 0.0
    %712 = vmatpush1.msra.mxu0 0.0
    %713 = vmatprep.mubr.f32.mxu0 0.0
    %714 = vmatmul.mubr.f32.gmra.mrb[0].mxu0 %v216
    %v715 = vpop.f32.mrb[0].mxu0
    %v716 = vadd.f32 %v648, %v715
    %v717 = vpop.f32.mrb[0].mxu0
    %718 = vmatprep.mubr.f32.mxu0 0.0
    %719 = vmatmul.mubr.f32.gmra.mrb[0].mxu0 %v219
    %v720 = vpop.f32.mrb[0].mxu0
    %v721 = vadd.f32 %v648, %v720
    %v722 = vpop.f32.mrb[0].mxu0
    %723 = vmatprep.mubr.f32.mxu0 0.0
    %724 = vmatmul.mubr.f32.gmra.mrb[0].mxu0 %v222
    %v725 = vpop.f32.mrb[0].mxu0
    %v726 = vadd.f32 %v648, %v725
    %v727 = vpop.f32.mrb[0].mxu0
    %728 = vmatprep.mubr.f32.mxu0 0.0
    %729 = vmatmul.mubr.f32.gmra.mrb[0].mxu0 %v225
    %v730 = vpop.f32.mrb[0].mxu0
    %v731 = vadd.f32 %v648, %v730
    %v732 = vpop.f32.mrb[0].mxu0
    %733 = vdwg.mxu0
    %v734 = vadd.f32 %v636, %v716
    %v735 = vadd.f32 %v637, %v721
    %v736 = vadd.f32 %v638, %v726
    %v737 = vadd.f32 %v639, %v731
    %v738 = vmax.f32 %v734, 0.0
    %v739 = vmax.f32 %v735, 0.0
    %v740 = vmax.f32 %v736, 0.0
    %v741 = vmax.f32 %v737, 0.0
    %vm742 = vcmp.ge.s32.totalorder %v163, 2
    %vm743 = vcmp.ge.s32.totalorder %v164, 2
    %vm744 = vcmp.ge.s32.totalorder %v165, 2
    %vm745 = vcmp.ge.s32.totalorder %v166, 2
    %v746 = vld [vmem:[#allocation2 + $0x118] sm:$0xff]
    %v747 = vld [vmem:[#allocation2 + $0x120] sm:$0xff]
    %v748 = vld [vmem:[#allocation2 + $0x128] sm:$0xff]
    %v749 = vld [vmem:[#allocation2 + $0x130] sm:$0xff]
    %v750 = vld [vmem:[#allocation2 + $0x138] sm:$0xff]
    %v751 = vld [vmem:[#allocation2 + $0x140] sm:$0xff]
    %v752 = vld [vmem:[#allocation2 + $0x148] sm:$0xff]
    %v753 = vld [vmem:[#allocation2 + $0x150] sm:$0xff]
    %v754 = vld [vmem:[#allocation2 + $0x158] sm:$0xff]
    %v755 = vld [vmem:[#allocation2 + $0x160] sm:$0xff]
    %v756 = vld [vmem:[#allocation2 + $0x168] sm:$0xff]
    %v757 = vld [vmem:[#allocation2 + $0x170] sm:$0xff]
    %v758 = vld [vmem:[#allocation2 + $0x178] sm:$0x1]
    %v759 = vld [vmem:[#allocation2 + $0x180] sm:$0xff]
    %v760 = vld [vmem:[#allocation2 + $0x188] sm:$0xff]
    %v761 = vld [vmem:[#allocation2 + $0x190] sm:$0xff]
    %v762 = vld [vmem:[#allocation2 + $0x198] sm:$0xff]
    %v763 = vld [vmem:[#allocation2 + $0x1a0] sm:$0xff]
    %v764 = vld [vmem:[#allocation2 + $0x1a8] sm:$0xff]
    %v765 = vld [vmem:[#allocation2 + $0x1b0] sm:$0xff]
    %v766 = vld [vmem:[#allocation2 + $0x1b8] sm:$0xff]
    %v767 = vld [vmem:[#allocation2 + $0x1c0] sm:$0xff]
    %v768 = vld [vmem:[#allocation2 + $0x1c8] sm:$0xff]
    %v769 = vld [vmem:[#allocation2 + $0x1d0] sm:$0xff]
    %v770 = vld [vmem:[#allocation2 + $0x1d8] sm:$0xff]
    %v771 = vld [vmem:[#allocation2 + $0x1e0] sm:$0x1]
    %v772 = vrot.slane %v738, 6
    %v773 = vrot.slane %v739, 6
    %v774 = vrot.slane %v740, 6
    %v775 = vrot.slane %v741, 6
    %vm776 = vcmp.lt.s32.totalorder %v159, 2
    %v777 = vsel %vm776, %v774, %v775
    %v778 = vsel %vm776, %v773, %v774
    %v779 = vsel %vm776, %v772, %v773
    %v780 = vsel %vm776, %v775, %v772
    %v781 = vsel %vm742, 1, 0
    %v782 = vsel %vm743, 1, 0
    %v783 = vsel %vm744, 1, 0
    %v784 = vsel %vm745, 1, 0
    %vm785 = vcmp.eq.s32.totalorder %v781, 1
    %vm786 = vcmp.eq.s32.totalorder %v782, 1
    %vm787 = vcmp.eq.s32.totalorder %v783, 1
    %vm788 = vcmp.eq.s32.totalorder %v784, 1
    %v789 = vsel %vm785, %v780, 0.0
    %v790 = vsel %vm786, %v779, 0.0
    %v791 = vsel %vm787, %v778, 0.0
    %v792 = vsel %vm788, %v777, 0.0
    %v794 = vsel %vm433, %v738, 0
    %v797 = vsel %vm433, %v739, 0
    %v800 = vsel %vm433, %v740, 0
    %v803 = vsel %vm433, %v741, 0
    %805 = vmatprep.subr.mxu0 0.0
    %806 = vmatpush1.msra.mxu0 %v752
    %807 = vmatprep.subr.mxu0 0.0
    %808 = vmatpush1.msra.mxu0 %v753
    %809 = vmatprep.subr.mxu0 0.0
    %810 = vmatpush1.msra.mxu0 %v754
    %811 = vmatprep.subr.mxu0 0.0
    %812 = vmatpush1.msra.mxu0 %v755
    %813 = vmatprep.subr.mxu0 0.0
    %814 = vmatpush1.msra.mxu0 %v756
    %815 = vmatprep.subr.mxu0 0.0
    %816 = vmatpush1.msra.mxu0 %v757
    %817 = vmatprep.subr.mxu0 0.0
    %818 = vmatpush1.msra.mxu0 0.0
    %819 = vmatprep.subr.mxu0 0.0
    %820 = vmatpush1.msra.mxu0 0.0
    %821 = vmatprep.subr.mxu0 0.0
    %822 = vmatpush1.msra.mxu0 0.0
    %823 = vmatprep.subr.mxu0 0.0
    %824 = vmatpush1.msra.mxu0 0.0
    %825 = vmatprep.subr.mxu0 0.0
    %826 = vmatpush1.msra.mxu0 0.0
    %827 = vmatprep.subr.mxu0 0.0
    %828 = vmatpush1.msra.mxu0 0.0
    %829 = vmatprep.subr.mxu0 0.0
    %830 = vmatpush1.msra.mxu0 0.0
    %831 = vmatprep.subr.mxu0 0.0
    %832 = vmatpush1.msra.mxu0 0.0
    %833 = vmatprep.subr.mxu0 0.0
    %834 = vmatpush1.msra.mxu0 0.0
    %835 = vmatprep.subr.mxu0 0.0
    %836 = vmatpush1.msra.mxu0 0.0
    %837 = vmatprep.subr.mxu0 0.0
    %838 = vmatpush1.msra.mxu0 0.0
    %839 = vmatprep.subr.mxu0 0.0
    %840 = vmatpush1.msra.mxu0 0.0
    %841 = vmatprep.subr.mxu0 0.0
    %842 = vmatpush1.msra.mxu0 0.0
    %843 = vmatprep.subr.mxu0 0.0
    %844 = vmatpush1.msra.mxu0 0.0
    %845 = vmatprep.subr.mxu0 0.0
    %846 = vmatpush1.msra.mxu0 0.0
    %847 = vmatprep.subr.mxu0 0.0
    %848 = vmatpush1.msra.mxu0 0.0
    %849 = vmatprep.subr.mxu0 0.0
    %850 = vmatpush1.msra.mxu0 0.0
    %851 = vmatprep.subr.mxu0 0.0
    %852 = vmatpush1.msra.mxu0 0.0
    %853 = vmatprep.subr.mxu0 0.0
    %854 = vmatpush1.msra.mxu0 0.0
    %855 = vmatprep.subr.mxu0 0.0
    %856 = vmatpush1.msra.mxu0 0.0
    %857 = vmatprep.subr.mxu0 0.0
    %858 = vmatpush1.msra.mxu0 0.0
    %859 = vmatprep.subr.mxu0 0.0
    %860 = vmatpush1.msra.mxu0 0.0
    %861 = vmatprep.subr.mxu0 0.0
    %862 = vmatpush1.msra.mxu0 0.0
    %863 = vmatprep.subr.mxu0 0.0
    %864 = vmatpush1.msra.mxu0 0.0
    %865 = vmatprep.subr.mxu0 0.0
    %866 = vmatpush1.msra.mxu0 0.0
    %867 = vmatprep.subr.mxu0 0.0
    %868 = vmatpush1.msra.mxu0 0.0
    %869 = vmatprep.mubr.f32.mxu0 0.0
    %870 = vmatmul.mubr.f32.gmra.mrb[0].mxu0 %v794
    %v871 = vpop.f32.mrb[0].mxu0
    %v872 = vadd.f32 0.0, %v871
    %v873 = vpop.f32.mrb[0].mxu0
    %874 = vmatprep.mubr.f32.mxu0 0.0
    %875 = vmatmul.mubr.f32.gmra.mrb[0].mxu0 %v797
    %v876 = vpop.f32.mrb[0].mxu0
    %v877 = vadd.f32 0.0, %v876
    %v878 = vpop.f32.mrb[0].mxu0
    %879 = vmatprep.mubr.f32.mxu0 0.0
    %880 = vmatmul.mubr.f32.gmra.mrb[0].mxu0 %v800
    %v881 = vpop.f32.mrb[0].mxu0
    %v882 = vadd.f32 0.0, %v881
    %v883 = vpop.f32.mrb[0].mxu0
    %884 = vmatprep.mubr.f32.mxu0 0.0
    %885 = vmatmul.mubr.f32.gmra.mrb[0].mxu0 %v803
    %v886 = vpop.f32.mrb[0].mxu0
    %v887 = vadd.f32 0.0, %v886
    %v888 = vpop.f32.mrb[0].mxu0
    %889 = vdwg.mxu0
    %v891 = vsel %vm433, %v789, 0
    %v894 = vsel %vm433, %v790, 0
    %v897 = vsel %vm433, %v791, 0
    %v900 = vsel %vm433, %v792, 0
    %902 = vmatprep.subr.mxu0 0.0
    %903 = vmatpush1.msra.mxu0 %v746
    %904 = vmatprep.subr.mxu0 0.0
    %905 = vmatpush1.msra.mxu0 %v747
    %906 = vmatprep.subr.mxu0 0.0
    %907 = vmatpush1.msra.mxu0 %v748
    %908 = vmatprep.subr.mxu0 0.0
    %909 = vmatpush1.msra.mxu0 %v749
    %910 = vmatprep.subr.mxu0 0.0
    %911 = vmatpush1.msra.mxu0 %v750
    %912 = vmatprep.subr.mxu0 0.0
    %913 = vmatpush1.msra.mxu0 %v751
    %914 = vmatprep.subr.mxu0 0.0
    %915 = vmatpush1.msra.mxu0 0.0
    %916 = vmatprep.subr.mxu0 0.0
    %917 = vmatpush1.msra.mxu0 0.0
    %918 = vmatprep.subr.mxu0 0.0
    %919 = vmatpush1.msra.mxu0 0.0
    %920 = vmatprep.subr.mxu0 0.0
    %921 = vmatpush1.msra.mxu0 0.0
    %922 = vmatprep.subr.mxu0 0.0
    %923 = vmatpush1.msra.mxu0 0.0
    %924 = vmatprep.subr.mxu0 0.0
    %925 = vmatpush1.msra.mxu0 0.0
    %926 = vmatprep.subr.mxu0 0.0
    %927 = vmatpush1.msra.mxu0 0.0
    %928 = vmatprep.subr.mxu0 0.0
    %929 = vmatpush1.msra.mxu0 0.0
    %930 = vmatprep.subr.mxu0 0.0
    %931 = vmatpush1.msra.mxu0 0.0
    %932 = vmatprep.subr.mxu0 0.0
    %933 = vmatpush1.msra.mxu0 0.0
    %934 = vmatprep.subr.mxu0 0.0
    %935 = vmatpush1.msra.mxu0 0.0
    %936 = vmatprep.subr.mxu0 0.0
    %937 = vmatpush1.msra.mxu0 0.0
    %938 = vmatprep.subr.mxu0 0.0
    %939 = vmatpush1.msra.mxu0 0.0
    %940 = vmatprep.subr.mxu0 0.0
    %941 = vmatpush1.msra.mxu0 0.0
    %942 = vmatprep.subr.mxu0 0.0
    %943 = vmatpush1.msra.mxu0 0.0
    %944 = vmatprep.subr.mxu0 0.0
    %945 = vmatpush1.msra.mxu0 0.0
    %946 = vmatprep.subr.mxu0 0.0
    %947 = vmatpush1.msra.mxu0 0.0
    %948 = vmatprep.subr.mxu0 0.0
    %949 = vmatpush1.msra.mxu0 0.0
    %950 = vmatprep.subr.mxu0 0.0
    %951 = vmatpush1.msra.mxu0 0.0
    %952 = vmatprep.subr.mxu0 0.0
    %953 = vmatpush1.msra.mxu0 0.0
    %954 = vmatprep.subr.mxu0 0.0
    %955 = vmatpush1.msra.mxu0 0.0
    %956 = vmatprep.subr.mxu0 0.0
    %957 = vmatpush1.msra.mxu0 0.0
    %958 = vmatprep.subr.mxu0 0.0
    %959 = vmatpush1.msra.mxu0 0.0
    %960 = vmatprep.subr.mxu0 0.0
    %961 = vmatpush1.msra.mxu0 0.0
    %962 = vmatprep.subr.mxu0 0.0
    %963 = vmatpush1.msra.mxu0 0.0
    %964 = vmatprep.subr.mxu0 0.0
    %965 = vmatpush1.msra.mxu0 0.0
    %966 = vmatprep.mubr.f32.mxu0 0.0
    %967 = vmatmul.mubr.f32.gmra.mrb[0].mxu0 %v891
    %v968 = vpop.f32.mrb[0].mxu0
    %v969 = vadd.f32 %v872, %v968
    %v970 = vpop.f32.mrb[0].mxu0
    %971 = vmatprep.mubr.f32.mxu0 0.0
    %972 = vmatmul.mubr.f32.gmra.mrb[0].mxu0 %v894
    %v973 = vpop.f32.mrb[0].mxu0
    %v974 = vadd.f32 %v877, %v973
    %v975 = vpop.f32.mrb[0].mxu0
    %976 = vmatprep.mubr.f32.mxu0 0.0
    %977 = vmatmul.mubr.f32.gmra.mrb[0].mxu0 %v897
    %v978 = vpop.f32.mrb[0].mxu0
    %v979 = vadd.f32 %v882, %v978
    %v980 = vpop.f32.mrb[0].mxu0
    %981 = vmatprep.mubr.f32.mxu0 0.0
    %982 = vmatmul.mubr.f32.gmra.mrb[0].mxu0 %v900
    %v983 = vpop.f32.mrb[0].mxu0
    %v984 = vadd.f32 %v887, %v983
    %v985 = vpop.f32.mrb[0].mxu0
    %986 = vdwg.mxu0
    %v987 = vlaneseq
    %v988 = vshrl.u32 %v987, 7
    %v989 = vsub.s32 0, %v988
    %v990 = vrot.slane %v758, %v989
    %v991 = vadd.f32 %v969, %v990
    %v992 = vadd.f32 %v974, %v990
    %v993 = vadd.f32 %v979, %v990
    %v994 = vadd.f32 %v984, %v990
    %v995 = vmax.f32 %v991, 0.0
    %v996 = vmax.f32 %v992, 0.0
    %v997 = vmax.f32 %v993, 0.0
    %v998 = vmax.f32 %v994, 0.0
    %v999 = vrot.slane %v995, 6
    %v1000 = vrot.slane %v996, 6
    %v1001 = vrot.slane %v997, 6
    %v1002 = vrot.slane %v998, 6
    %v1003 = vsel %vm776, %v1001, %v1002
    %v1004 = vsel %vm776, %v1000, %v1001
    %v1005 = vsel %vm776, %v999, %v1000
    %v1006 = vsel %vm776, %v1002, %v999
    %v1007 = vsel %vm785, %v1006, 0.0
    %v1008 = vsel %vm786, %v1005, 0.0
    %v1009 = vsel %vm787, %v1004, 0.0
    %v1010 = vsel %vm788, %v1003, 0.0
    %v1012 = vsel %vm433, %v995, 0
    %v1015 = vsel %vm433, %v996, 0
    %v1018 = vsel %vm433, %v997, 0
    %v1021 = vsel %vm433, %v998, 0
    %1023 = vmatprep.subr.mxu0 0.0
    %1024 = vmatpush1.msra.mxu0 %v765
    %1025 = vmatprep.subr.mxu0 0.0
    %1026 = vmatpush1.msra.mxu0 %v766
    %1027 = vmatprep.subr.mxu0 0.0
    %1028 = vmatpush1.msra.mxu0 %v767
    %1029 = vmatprep.subr.mxu0 0.0
    %1030 = vmatpush1.msra.mxu0 %v768
    %1031 = vmatprep.subr.mxu0 0.0
    %1032 = vmatpush1.msra.mxu0 %v769
    %1033 = vmatprep.subr.mxu0 0.0
    %1034 = vmatpush1.msra.mxu0 %v770
    %1035 = vmatprep.subr.mxu0 0.0
    %1036 = vmatpush1.msra.mxu0 0.0
    %1037 = vmatprep.subr.mxu0 0.0
    %1038 = vmatpush1.msra.mxu0 0.0
    %1039 = vmatprep.subr.mxu0 0.0
    %1040 = vmatpush1.msra.mxu0 0.0
    %1041 = vmatprep.subr.mxu0 0.0
    %1042 = vmatpush1.msra.mxu0 0.0
    %1043 = vmatprep.subr.mxu0 0.0
    %1044 = vmatpush1.msra.mxu0 0.0
    %1045 = vmatprep.subr.mxu0 0.0
    %1046 = vmatpush1.msra.mxu0 0.0
    %1047 = vmatprep.subr.mxu0 0.0
    %1048 = vmatpush1.msra.mxu0 0.0
    %1049 = vmatprep.subr.mxu0 0.0
    %1050 = vmatpush1.msra.mxu0 0.0
    %1051 = vmatprep.subr.mxu0 0.0
    %1052 = vmatpush1.msra.mxu0 0.0
    %1053 = vmatprep.subr.mxu0 0.0
    %1054 = vmatpush1.msra.mxu0 0.0
    %1055 = vmatprep.subr.mxu0 0.0
    %1056 = vmatpush1.msra.mxu0 0.0
    %1057 = vmatprep.subr.mxu0 0.0
    %1058 = vmatpush1.msra.mxu0 0.0
    %1059 = vmatprep.subr.mxu0 0.0
    %1060 = vmatpush1.msra.mxu0 0.0
    %1061 = vmatprep.subr.mxu0 0.0
    %1062 = vmatpush1.msra.mxu0 0.0
    %1063 = vmatprep.subr.mxu0 0.0
    %1064 = vmatpush1.msra.mxu0 0.0
    %1065 = vmatprep.subr.mxu0 0.0
    %1066 = vmatpush1.msra.mxu0 0.0
    %1067 = vmatprep.subr.mxu0 0.0
    %1068 = vmatpush1.msra.mxu0 0.0
    %1069 = vmatprep.subr.mxu0 0.0
    %1070 = vmatpush1.msra.mxu0 0.0
    %1071 = vmatprep.subr.mxu0 0.0
    %1072 = vmatpush1.msra.mxu0 0.0
    %1073 = vmatprep.subr.mxu0 0.0
    %1074 = vmatpush1.msra.mxu0 0.0
    %1075 = vmatprep.subr.mxu0 0.0
    %1076 = vmatpush1.msra.mxu0 0.0
    %1077 = vmatprep.subr.mxu0 0.0
    %1078 = vmatpush1.msra.mxu0 0.0
    %1079 = vmatprep.subr.mxu0 0.0
    %1080 = vmatpush1.msra.mxu0 0.0
    %1081 = vmatprep.subr.mxu0 0.0
    %1082 = vmatpush1.msra.mxu0 0.0
    %1083 = vmatprep.subr.mxu0 0.0
    %1084 = vmatpush1.msra.mxu0 0.0
    %1085 = vmatprep.subr.mxu0 0.0
    %1086 = vmatpush1.msra.mxu0 0.0
    %1087 = vmatprep.mubr.f32.mxu0 0.0
    %1088 = vmatmul.mubr.f32.gmra.mrb[0].mxu0 %v1012
    %v1089 = vpop.f32.mrb[0].mxu0
    %v1090 = vadd.f32 0.0, %v1089
    %v1091 = vpop.f32.mrb[0].mxu0
    %1092 = vmatprep.mubr.f32.mxu0 0.0
    %1093 = vmatmul.mubr.f32.gmra.mrb[0].mxu0 %v1015
    %v1094 = vpop.f32.mrb[0].mxu0
    %v1095 = vadd.f32 0.0, %v1094
    %v1096 = vpop.f32.mrb[0].mxu0
    %1097 = vmatprep.mubr.f32.mxu0 0.0
    %1098 = vmatmul.mubr.f32.gmra.mrb[0].mxu0 %v1018
    %v1099 = vpop.f32.mrb[0].mxu0
    %v1100 = vadd.f32 0.0, %v1099
    %v1101 = vpop.f32.mrb[0].mxu0
    %1102 = vmatprep.mubr.f32.mxu0 0.0
    %1103 = vmatmul.mubr.f32.gmra.mrb[0].mxu0 %v1021
    %v1104 = vpop.f32.mrb[0].mxu0
    %v1105 = vadd.f32 0.0, %v1104
    %v1106 = vpop.f32.mrb[0].mxu0
    %1107 = vdwg.mxu0
    %v1109 = vsel %vm433, %v1007, 0
    %v1112 = vsel %vm433, %v1008, 0
    %v1115 = vsel %vm433, %v1009, 0
    %v1118 = vsel %vm433, %v1010, 0
    %1120 = vmatprep.subr.mxu0 0.0
    %1121 = vmatpush1.msra.mxu0 %v759
    %1122 = vmatprep.subr.mxu0 0.0
    %1123 = vmatpush1.msra.mxu0 %v760
    %1124 = vmatprep.subr.mxu0 0.0
    %1125 = vmatpush1.msra.mxu0 %v761
    %1126 = vmatprep.subr.mxu0 0.0
    %1127 = vmatpush1.msra.mxu0 %v762
    %1128 = vmatprep.subr.mxu0 0.0
    %1129 = vmatpush1.msra.mxu0 %v763
    %1130 = vmatprep.subr.mxu0 0.0
    %1131 = vmatpush1.msra.mxu0 %v764
    %1132 = vmatprep.subr.mxu0 0.0
    %1133 = vmatpush1.msra.mxu0 0.0
    %1134 = vmatprep.subr.mxu0 0.0
    %1135 = vmatpush1.msra.mxu0 0.0
    %1136 = vmatprep.subr.mxu0 0.0
    %1137 = vmatpush1.msra.mxu0 0.0
    %1138 = vmatprep.subr.mxu0 0.0
    %1139 = vmatpush1.msra.mxu0 0.0
    %1140 = vmatprep.subr.mxu0 0.0
    %1141 = vmatpush1.msra.mxu0 0.0
    %1142 = vmatprep.subr.mxu0 0.0
    %1143 = vmatpush1.msra.mxu0 0.0
    %1144 = vmatprep.subr.mxu0 0.0
    %1145 = vmatpush1.msra.mxu0 0.0
    %1146 = vmatprep.subr.mxu0 0.0
    %1147 = vmatpush1.msra.mxu0 0.0
    %1148 = vmatprep.subr.mxu0 0.0
    %1149 = vmatpush1.msra.mxu0 0.0
    %1150 = vmatprep.subr.mxu0 0.0
    %1151 = vmatpush1.msra.mxu0 0.0
    %1152 = vmatprep.subr.mxu0 0.0
    %1153 = vmatpush1.msra.mxu0 0.0
    %1154 = vmatprep.subr.mxu0 0.0
    %1155 = vmatpush1.msra.mxu0 0.0
    %1156 = vmatprep.subr.mxu0 0.0
    %1157 = vmatpush1.msra.mxu0 0.0
    %1158 = vmatprep.subr.mxu0 0.0
    %1159 = vmatpush1.msra.mxu0 0.0
    %1160 = vmatprep.subr.mxu0 0.0
    %1161 = vmatpush1.msra.mxu0 0.0
    %1162 = vmatprep.subr.mxu0 0.0
    %1163 = vmatpush1.msra.mxu0 0.0
    %1164 = vmatprep.subr.mxu0 0.0
    %1165 = vmatpush1.msra.mxu0 0.0
    %1166 = vmatprep.subr.mxu0 0.0
    %1167 = vmatpush1.msra.mxu0 0.0
    %1168 = vmatprep.subr.mxu0 0.0
    %1169 = vmatpush1.msra.mxu0 0.0
    %1170 = vmatprep.subr.mxu0 0.0
    %1171 = vmatpush1.msra.mxu0 0.0
    %1172 = vmatprep.subr.mxu0 0.0
    %1173 = vmatpush1.msra.mxu0 0.0
    %1174 = vmatprep.subr.mxu0 0.0
    %1175 = vmatpush1.msra.mxu0 0.0
    %1176 = vmatprep.subr.mxu0 0.0
    %1177 = vmatpush1.msra.mxu0 0.0
    %1178 = vmatprep.subr.mxu0 0.0
    %1179 = vmatpush1.msra.mxu0 0.0
    %1180 = vmatprep.subr.mxu0 0.0
    %1181 = vmatpush1.msra.mxu0 0.0
    %1182 = vmatprep.subr.mxu0 0.0
    %1183 = vmatpush1.msra.mxu0 0.0
    %1184 = vmatprep.mubr.f32.mxu0 0.0
    %1185 = vmatmul.mubr.f32.gmra.mrb[0].mxu0 %v1109
    %v1186 = vpop.f32.mrb[0].mxu0
    %v1187 = vadd.f32 %v1090, %v1186
    %v1188 = vpop.f32.mrb[0].mxu0
    %1189 = vmatprep.mubr.f32.mxu0 0.0
    %1190 = vmatmul.mubr.f32.gmra.mrb[0].mxu0 %v1112
    %v1191 = vpop.f32.mrb[0].mxu0
    %v1192 = vadd.f32 %v1095, %v1191
    %v1193 = vpop.f32.mrb[0].mxu0
    %1194 = vmatprep.mubr.f32.mxu0 0.0
    %1195 = vmatmul.mubr.f32.gmra.mrb[0].mxu0 %v1115
    %v1196 = vpop.f32.mrb[0].mxu0
    %v1197 = vadd.f32 %v1100, %v1196
    %v1198 = vpop.f32.mrb[0].mxu0
    %1199 = vmatprep.mubr.f32.mxu0 0.0
    %1200 = vmatmul.mubr.f32.gmra.mrb[0].mxu0 %v1118
    %v1201 = vpop.f32.mrb[0].mxu0
    %v1202 = vadd.f32 %v1105, %v1201
    %v1203 = vpop.f32.mrb[0].mxu0
    %1204 = vdwg.mxu0
    %v1205 = vlaneseq
    %v1206 = vshrl.u32 %v1205, 7
    %v1207 = vsub.s32 0, %v1206
    %v1208 = vrot.slane %v771, %v1207
    %v1209 = vadd.f32 %v1187, %v1208
    %v1210 = vadd.f32 %v1192, %v1208
    %v1211 = vadd.f32 %v1197, %v1208
    %v1212 = vadd.f32 %v1202, %v1208
    %v1213 = vmax.f32 %v1209, 0.0
    %v1214 = vmax.f32 %v1210, 0.0
    %v1215 = vmax.f32 %v1211, 0.0
    %v1216 = vmax.f32 %v1212, 0.0
    %v1217 = vadd.f32 %v1213, %v738
    %v1218 = vadd.f32 %v1214, %v739
    %v1219 = vadd.f32 %v1215, %v740
    %v1220 = vadd.f32 %v1216, %v741
    %v1221 = vmax.f32 %v1217, 0.0
    %v1222 = vmax.f32 %v1218, 0.0
    %v1223 = vmax.f32 %v1219, 0.0
    %v1224 = vmax.f32 %v1220, 0.0
    %vm1225 = vcmp.ge.s32.totalorder %v163, 4
    %vm1226 = vcmp.ge.s32.totalorder %v164, 4
    %vm1227 = vcmp.ge.s32.totalorder %v165, 4
    %vm1228 = vcmp.ge.s32.totalorder %v166, 4
    %v1229 = vld [vmem:[#allocation2 + $0x1e8] sm:$0xff]
    %v1230 = vld [vmem:[#allocation2 + $0x1f0] sm:$0xff]
    %v1231 = vld [vmem:[#allocation2 + $0x1f8] sm:$0xff]
    %v1232 = vld [vmem:[#allocation2 + $0x200] sm:$0xff]
    %v1233 = vld [vmem:[#allocation2 + $0x208] sm:$0xff]
    %v1234 = vld [vmem:[#allocation2 + $0x210] sm:$0xff]
    %v1235 = vld [vmem:[#allocation2 + $0x218] sm:$0xff]
    %v1236 = vld [vmem:[#allocation2 + $0x220] sm:$0xff]
    %v1237 = vld [vmem:[#allocation2 + $0x228] sm:$0xff]
    %v1238 = vld [vmem:[#allocation2 + $0x230] sm:$0xff]
    %v1239 = vld [vmem:[#allocation2 + $0x238] sm:$0xff]
    %v1240 = vld [vmem:[#allocation2 + $0x240] sm:$0xff]
    %v1241 = vld [vmem:[#allocation2 + $0x248] sm:$0x1]
    %v1242 = vld [vmem:[#allocation2 + $0x250] sm:$0xff]
    %v1243 = vld [vmem:[#allocation2 + $0x258] sm:$0xff]
    %v1244 = vld [vmem:[#allocation2 + $0x260] sm:$0xff]
    %v1245 = vld [vmem:[#allocation2 + $0x268] sm:$0xff]
    %v1246 = vld [vmem:[#allocation2 + $0x270] sm:$0xff]
    %v1247 = vld [vmem:[#allocation2 + $0x278] sm:$0xff]
    %v1248 = vld [vmem:[#allocation2 + $0x280] sm:$0xff]
    %v1249 = vld [vmem:[#allocation2 + $0x288] sm:$0xff]
    %v1250 = vld [vmem:[#allocation2 + $0x290] sm:$0x1]
    %v1251 = vrot.slane %v1221, 4
    %v1252 = vrot.slane %v1222, 4
    %v1253 = vrot.slane %v1223, 4
    %v1254 = vrot.slane %v1224, 4
    %vm1255 = vcmp.lt.s32.totalorder %v159, 4
    %v1256 = vsel %vm1255, %v1253, %v1254
    %v1257 = vsel %vm1255, %v1252, %v1253
    %v1258 = vsel %vm1255, %v1251, %v1252
    %v1259 = vsel %vm1255, %v1254, %v1251
    %v1260 = vsel %vm1225, 1, 0
    %v1261 = vsel %vm1226, 1, 0
    %v1262 = vsel %vm1227, 1, 0
    %v1263 = vsel %vm1228, 1, 0
    %vm1264 = vcmp.eq.s32.totalorder %v1260, 1
    %vm1265 = vcmp.eq.s32.totalorder %v1261, 1
    %vm1266 = vcmp.eq.s32.totalorder %v1262, 1
    %vm1267 = vcmp.eq.s32.totalorder %v1263, 1
    %v1268 = vsel %vm1264, %v1259, 0.0
    %v1269 = vsel %vm1265, %v1258, 0.0
    %v1270 = vsel %vm1266, %v1257, 0.0
    %v1271 = vsel %vm1267, %v1256, 0.0
    %v1273 = vsel %vm433, %v1221, 0
    %v1276 = vsel %vm433, %v1222, 0
    %v1279 = vsel %vm433, %v1223, 0
    %v1282 = vsel %vm433, %v1224, 0
    %1284 = vmatprep.subr.mxu0 0.0
    %1285 = vmatpush1.msra.mxu0 %v1235
    %1286 = vmatprep.subr.mxu0 0.0
    %1287 = vmatpush1.msra.mxu0 %v1236
    %1288 = vmatprep.subr.mxu0 0.0
    %1289 = vmatpush1.msra.mxu0 %v1237
    %1290 = vmatprep.subr.mxu0 0.0
    %1291 = vmatpush1.msra.mxu0 %v1238
    %1292 = vmatprep.subr.mxu0 0.0
    %1293 = vmatpush1.msra.mxu0 %v1239
    %1294 = vmatprep.subr.mxu0 0.0
    %1295 = vmatpush1.msra.mxu0 %v1240
    %1296 = vmatprep.subr.mxu0 0.0
    %1297 = vmatpush1.msra.mxu0 0.0
    %1298 = vmatprep.subr.mxu0 0.0
    %1299 = vmatpush1.msra.mxu0 0.0
    %1300 = vmatprep.subr.mxu0 0.0
    %1301 = vmatpush1.msra.mxu0 0.0
    %1302 = vmatprep.subr.mxu0 0.0
    %1303 = vmatpush1.msra.mxu0 0.0
    %1304 = vmatprep.subr.mxu0 0.0
    %1305 = vmatpush1.msra.mxu0 0.0
    %1306 = vmatprep.subr.mxu0 0.0
    %1307 = vmatpush1.msra.mxu0 0.0
    %1308 = vmatprep.subr.mxu0 0.0
    %1309 = vmatpush1.msra.mxu0 0.0
    %1310 = vmatprep.subr.mxu0 0.0
    %1311 = vmatpush1.msra.mxu0 0.0
    %1312 = vmatprep.subr.mxu0 0.0
    %1313 = vmatpush1.msra.mxu0 0.0
    %1314 = vmatprep.subr.mxu0 0.0
    %1315 = vmatpush1.msra.mxu0 0.0
    %1316 = vmatprep.subr.mxu0 0.0
    %1317 = vmatpush1.msra.mxu0 0.0
    %1318 = vmatprep.subr.mxu0 0.0
    %1319 = vmatpush1.msra.mxu0 0.0
    %1320 = vmatprep.subr.mxu0 0.0
    %1321 = vmatpush1.msra.mxu0 0.0
    %1322 = vmatprep.subr.mxu0 0.0
    %1323 = vmatpush1.msra.mxu0 0.0
    %1324 = vmatprep.subr.mxu0 0.0
    %1325 = vmatpush1.msra.mxu0 0.0
    %1326 = vmatprep.subr.mxu0 0.0
    %1327 = vmatpush1.msra.mxu0 0.0
    %1328 = vmatprep.subr.mxu0 0.0
    %1329 = vmatpush1.msra.mxu0 0.0
    %1330 = vmatprep.subr.mxu0 0.0
    %1331 = vmatpush1.msra.mxu0 0.0
    %1332 = vmatprep.subr.mxu0 0.0
    %1333 = vmatpush1.msra.mxu0 0.0
    %1334 = vmatprep.subr.mxu0 0.0
    %1335 = vmatpush1.msra.mxu0 0.0
    %1336 = vmatprep.subr.mxu0 0.0
    %1337 = vmatpush1.msra.mxu0 0.0
    %1338 = vmatprep.subr.mxu0 0.0
    %1339 = vmatpush1.msra.mxu0 0.0
    %1340 = vmatprep.subr.mxu0 0.0
    %1341 = vmatpush1.msra.mxu0 0.0
    %1342 = vmatprep.subr.mxu0 0.0
    %1343 = vmatpush1.msra.mxu0 0.0
    %1344 = vmatprep.subr.mxu0 0.0
    %1345 = vmatpush1.msra.mxu0 0.0
    %1346 = vmatprep.subr.mxu0 0.0
    %1347 = vmatpush1.msra.mxu0 0.0
    %1348 = vmatprep.mubr.f32.mxu0 0.0
    %1349 = vmatmul.mubr.f32.gmra.mrb[0].mxu0 %v1273
    %v1350 = vpop.f32.mrb[0].mxu0
    %v1351 = vadd.f32 0.0, %v1350
    %v1352 = vpop.f32.mrb[0].mxu0
    %1353 = vmatprep.mubr.f32.mxu0 0.0
    %1354 = vmatmul.mubr.f32.gmra.mrb[0].mxu0 %v1276
    %v1355 = vpop.f32.mrb[0].mxu0
    %v1356 = vadd.f32 0.0, %v1355
    %v1357 = vpop.f32.mrb[0].mxu0
    %1358 = vmatprep.mubr.f32.mxu0 0.0
    %1359 = vmatmul.mubr.f32.gmra.mrb[0].mxu0 %v1279
    %v1360 = vpop.f32.mrb[0].mxu0
    %v1361 = vadd.f32 0.0, %v1360
    %v1362 = vpop.f32.mrb[0].mxu0
    %1363 = vmatprep.mubr.f32.mxu0 0.0
    %1364 = vmatmul.mubr.f32.gmra.mrb[0].mxu0 %v1282
    %v1365 = vpop.f32.mrb[0].mxu0
    %v1366 = vadd.f32 0.0, %v1365
    %v1367 = vpop.f32.mrb[0].mxu0
    %1368 = vdwg.mxu0
    %v1370 = vsel %vm433, %v1268, 0
    %v1373 = vsel %vm433, %v1269, 0
    %v1376 = vsel %vm433, %v1270, 0
    %v1379 = vsel %vm433, %v1271, 0
    %1381 = vmatprep.subr.mxu0 0.0
    %1382 = vmatpush1.msra.mxu0 %v1229
    %1383 = vmatprep.subr.mxu0 0.0
    %1384 = vmatpush1.msra.mxu0 %v1230
    %1385 = vmatprep.subr.mxu0 0.0
    %1386 = vmatpush1.msra.mxu0 %v1231
    %1387 = vmatprep.subr.mxu0 0.0
    %1388 = vmatpush1.msra.mxu0 %v1232
    %1389 = vmatprep.subr.mxu0 0.0
    %1390 = vmatpush1.msra.mxu0 %v1233
    %1391 = vmatprep.subr.mxu0 0.0
    %1392 = vmatpush1.msra.mxu0 %v1234
    %1393 = vmatprep.subr.mxu0 0.0
    %1394 = vmatpush1.msra.mxu0 0.0
    %1395 = vmatprep.subr.mxu0 0.0
    %1396 = vmatpush1.msra.mxu0 0.0
    %1397 = vmatprep.subr.mxu0 0.0
    %1398 = vmatpush1.msra.mxu0 0.0
    %1399 = vmatprep.subr.mxu0 0.0
    %1400 = vmatpush1.msra.mxu0 0.0
    %1401 = vmatprep.subr.mxu0 0.0
    %1402 = vmatpush1.msra.mxu0 0.0
    %1403 = vmatprep.subr.mxu0 0.0
    %1404 = vmatpush1.msra.mxu0 0.0
    %1405 = vmatprep.subr.mxu0 0.0
    %1406 = vmatpush1.msra.mxu0 0.0
    %1407 = vmatprep.subr.mxu0 0.0
    %1408 = vmatpush1.msra.mxu0 0.0
    %1409 = vmatprep.subr.mxu0 0.0
    %1410 = vmatpush1.msra.mxu0 0.0
    %1411 = vmatprep.subr.mxu0 0.0
    %1412 = vmatpush1.msra.mxu0 0.0
    %1413 = vmatprep.subr.mxu0 0.0
    %1414 = vmatpush1.msra.mxu0 0.0
    %1415 = vmatprep.subr.mxu0 0.0
    %1416 = vmatpush1.msra.mxu0 0.0
    %1417 = vmatprep.subr.mxu0 0.0
    %1418 = vmatpush1.msra.mxu0 0.0
    %1419 = vmatprep.subr.mxu0 0.0
    %1420 = vmatpush1.msra.mxu0 0.0
    %1421 = vmatprep.subr.mxu0 0.0
    %1422 = vmatpush1.msra.mxu0 0.0
    %1423 = vmatprep.subr.mxu0 0.0
    %1424 = vmatpush1.msra.mxu0 0.0
    %1425 = vmatprep.subr.mxu0 0.0
    %1426 = vmatpush1.msra.mxu0 0.0
    %1427 = vmatprep.subr.mxu0 0.0
    %1428 = vmatpush1.msra.mxu0 0.0
    %1429 = vmatprep.subr.mxu0 0.0
    %1430 = vmatpush1.msra.mxu0 0.0
    %1431 = vmatprep.subr.mxu0 0.0
    %1432 = vmatpush1.msra.mxu0 0.0
    %1433 = vmatprep.subr.mxu0 0.0
    %1434 = vmatpush1.msra.mxu0 0.0
    %1435 = vmatprep.subr.mxu0 0.0
    %1436 = vmatpush1.msra.mxu0 0.0
    %1437 = vmatprep.subr.mxu0 0.0
    %1438 = vmatpush1.msra.mxu0 0.0
    %1439 = vmatprep.subr.mxu0 0.0
    %1440 = vmatpush1.msra.mxu0 0.0
    %1441 = vmatprep.subr.mxu0 0.0
    %1442 = vmatpush1.msra.mxu0 0.0
    %1443 = vmatprep.subr.mxu0 0.0
    %1444 = vmatpush1.msra.mxu0 0.0
    %1445 = vmatprep.mubr.f32.mxu0 0.0
    %1446 = vmatmul.mubr.f32.gmra.mrb[0].mxu0 %v1370
    %v1447 = vpop.f32.mrb[0].mxu0
    %v1448 = vadd.f32 %v1351, %v1447
    %v1449 = vpop.f32.mrb[0].mxu0
    %1450 = vmatprep.mubr.f32.mxu0 0.0
    %1451 = vmatmul.mubr.f32.gmra.mrb[0].mxu0 %v1373
    %v1452 = vpop.f32.mrb[0].mxu0
    %v1453 = vadd.f32 %v1356, %v1452
    %v1454 = vpop.f32.mrb[0].mxu0
    %1455 = vmatprep.mubr.f32.mxu0 0.0
    %1456 = vmatmul.mubr.f32.gmra.mrb[0].mxu0 %v1376
    %v1457 = vpop.f32.mrb[0].mxu0
    %v1458 = vadd.f32 %v1361, %v1457
    %v1459 = vpop.f32.mrb[0].mxu0
    %1460 = vmatprep.mubr.f32.mxu0 0.0
    %1461 = vmatmul.mubr.f32.gmra.mrb[0].mxu0 %v1379
    %v1462 = vpop.f32.mrb[0].mxu0
    %v1463 = vadd.f32 %v1366, %v1462
    %v1464 = vpop.f32.mrb[0].mxu0
    %1465 = vdwg.mxu0
    %v1466 = vlaneseq
    %v1467 = vshrl.u32 %v1466, 7
    %v1468 = vsub.s32 0, %v1467
    %v1469 = vrot.slane %v1241, %v1468
    %v1470 = vadd.f32 %v1448, %v1469
    %v1471 = vadd.f32 %v1453, %v1469
    %v1472 = vadd.f32 %v1458, %v1469
    %v1473 = vadd.f32 %v1463, %v1469
    %v1474 = vmax.f32 %v1470, 0.0
    %v1475 = vmax.f32 %v1471, 0.0
    %v1476 = vmax.f32 %v1472, 0.0
    %v1477 = vmax.f32 %v1473, 0.0
    %v1478 = vrot.slane %v1474, 4
    %v1479 = vrot.slane %v1475, 4
    %v1480 = vrot.slane %v1476, 4
    %v1481 = vrot.slane %v1477, 4
    %v1482 = vsel %vm1255, %v1480, %v1481
    %v1483 = vsel %vm1255, %v1479, %v1480
    %v1484 = vsel %vm1255, %v1478, %v1479
    %v1485 = vsel %vm1255, %v1481, %v1478
    %v1486 = vsel %vm1264, %v1485, 0.0
    %v1487 = vsel %vm1265, %v1484, 0.0
    %v1488 = vsel %vm1266, %v1483, 0.0
    %v1489 = vsel %vm1267, %v1482, 0.0
    %v1491 = vsel %vm214, %v1474, 0
    %v1494 = vsel %vm214, %v1475, 0
    %v1497 = vsel %vm214, %v1476, 0
    %v1500 = vsel %vm214, %v1477, 0
    %1502 = vmatprep.subr.mxu0 0.0
    %1503 = vmatpush1.msra.mxu0 %v1246
    %1504 = vmatprep.subr.mxu0 0.0
    %1505 = vmatpush1.msra.mxu0 %v1247
    %1506 = vmatprep.subr.mxu0 0.0
    %1507 = vmatpush1.msra.mxu0 %v1248
    %1508 = vmatprep.subr.mxu0 0.0
    %1509 = vmatpush1.msra.mxu0 %v1249
    %1510 = vmatprep.subr.mxu0 0.0
    %1511 = vmatpush1.msra.mxu0 0.0
    %1512 = vmatprep.subr.mxu0 0.0
    %1513 = vmatpush1.msra.mxu0 0.0
    %1514 = vmatprep.subr.mxu0 0.0
    %1515 = vmatpush1.msra.mxu0 0.0
    %1516 = vmatprep.subr.mxu0 0.0
    %1517 = vmatpush1.msra.mxu0 0.0
    %1518 = vmatprep.subr.mxu0 0.0
    %1519 = vmatpush1.msra.mxu0 0.0
    %1520 = vmatprep.subr.mxu0 0.0
    %1521 = vmatpush1.msra.mxu0 0.0
    %1522 = vmatprep.subr.mxu0 0.0
    %1523 = vmatpush1.msra.mxu0 0.0
    %1524 = vmatprep.subr.mxu0 0.0
    %1525 = vmatpush1.msra.mxu0 0.0
    %1526 = vmatprep.subr.mxu0 0.0
    %1527 = vmatpush1.msra.mxu0 0.0
    %1528 = vmatprep.subr.mxu0 0.0
    %1529 = vmatpush1.msra.mxu0 0.0
    %1530 = vmatprep.subr.mxu0 0.0
    %1531 = vmatpush1.msra.mxu0 0.0
    %1532 = vmatprep.subr.mxu0 0.0
    %1533 = vmatpush1.msra.mxu0 0.0
    %1534 = vmatprep.subr.mxu0 0.0
    %1535 = vmatpush1.msra.mxu0 0.0
    %1536 = vmatprep.subr.mxu0 0.0
    %1537 = vmatpush1.msra.mxu0 0.0
    %1538 = vmatprep.subr.mxu0 0.0
    %1539 = vmatpush1.msra.mxu0 0.0
    %1540 = vmatprep.subr.mxu0 0.0
    %1541 = vmatpush1.msra.mxu0 0.0
    %1542 = vmatprep.subr.mxu0 0.0
    %1543 = vmatpush1.msra.mxu0 0.0
    %1544 = vmatprep.subr.mxu0 0.0
    %1545 = vmatpush1.msra.mxu0 0.0
    %1546 = vmatprep.subr.mxu0 0.0
    %1547 = vmatpush1.msra.mxu0 0.0
    %1548 = vmatprep.subr.mxu0 0.0
    %1549 = vmatpush1.msra.mxu0 0.0
    %1550 = vmatprep.subr.mxu0 0.0
    %1551 = vmatpush1.msra.mxu0 0.0
    %1552 = vmatprep.subr.mxu0 0.0
    %1553 = vmatpush1.msra.mxu0 0.0
    %1554 = vmatprep.subr.mxu0 0.0
    %1555 = vmatpush1.msra.mxu0 0.0
    %1556 = vmatprep.subr.mxu0 0.0
    %1557 = vmatpush1.msra.mxu0 0.0
    %1558 = vmatprep.subr.mxu0 0.0
    %1559 = vmatpush1.msra.mxu0 0.0
    %1560 = vmatprep.subr.mxu0 0.0
    %1561 = vmatpush1.msra.mxu0 0.0
    %1562 = vmatprep.subr.mxu0 0.0
    %1563 = vmatpush1.msra.mxu0 0.0
    %1564 = vmatprep.subr.mxu0 0.0
    %1565 = vmatpush1.msra.mxu0 0.0
    %1566 = vmatprep.mubr.f32.mxu0 0.0
    %1567 = vmatmul.mubr.f32.gmra.mrb[0].mxu0 %v1491
    %v1568 = vpop.f32.mrb[0].mxu0
    %v1569 = vadd.f32 0.0, %v1568
    %v1570 = vpop.f32.mrb[0].mxu0
    %1571 = vmatprep.mubr.f32.mxu0 0.0
    %1572 = vmatmul.mubr.f32.gmra.mrb[0].mxu0 %v1494
    %v1573 = vpop.f32.mrb[0].mxu0
    %v1574 = vadd.f32 0.0, %v1573
    %v1575 = vpop.f32.mrb[0].mxu0
    %1576 = vmatprep.mubr.f32.mxu0 0.0
    %1577 = vmatmul.mubr.f32.gmra.mrb[0].mxu0 %v1497
    %v1578 = vpop.f32.mrb[0].mxu0
    %v1579 = vadd.f32 0.0, %v1578
    %v1580 = vpop.f32.mrb[0].mxu0
    %1581 = vmatprep.mubr.f32.mxu0 0.0
    %1582 = vmatmul.mubr.f32.gmra.mrb[0].mxu0 %v1500
    %v1583 = vpop.f32.mrb[0].mxu0
    %v1584 = vadd.f32 0.0, %v1583
    %v1585 = vpop.f32.mrb[0].mxu0
    %1586 = vdwg.mxu0
    %v1588 = vsel %vm214, %v1486, 0
    %v1591 = vsel %vm214, %v1487, 0
    %v1594 = vsel %vm214, %v1488, 0
    %v1597 = vsel %vm214, %v1489, 0
    %1599 = vmatprep.subr.mxu0 0.0
    %1600 = vmatpush1.msra.mxu0 %v1242
    %1601 = vmatprep.subr.mxu0 0.0
    %1602 = vmatpush1.msra.mxu0 %v1243
    %1603 = vmatprep.subr.mxu0 0.0
    %1604 = vmatpush1.msra.mxu0 %v1244
    %1605 = vmatprep.subr.mxu0 0.0
    %1606 = vmatpush1.msra.mxu0 %v1245
    %1607 = vmatprep.subr.mxu0 0.0
    %1608 = vmatpush1.msra.mxu0 0.0
    %1609 = vmatprep.subr.mxu0 0.0
    %1610 = vmatpush1.msra.mxu0 0.0
    %1611 = vmatprep.subr.mxu0 0.0
    %1612 = vmatpush1.msra.mxu0 0.0
    %1613 = vmatprep.subr.mxu0 0.0
    %1614 = vmatpush1.msra.mxu0 0.0
    %1615 = vmatprep.subr.mxu0 0.0
    %1616 = vmatpush1.msra.mxu0 0.0
    %1617 = vmatprep.subr.mxu0 0.0
    %1618 = vmatpush1.msra.mxu0 0.0
    %1619 = vmatprep.subr.mxu0 0.0
    %1620 = vmatpush1.msra.mxu0 0.0
    %1621 = vmatprep.subr.mxu0 0.0
    %1622 = vmatpush1.msra.mxu0 0.0
    %1623 = vmatprep.subr.mxu0 0.0
    %1624 = vmatpush1.msra.mxu0 0.0
    %1625 = vmatprep.subr.mxu0 0.0
    %1626 = vmatpush1.msra.mxu0 0.0
    %1627 = vmatprep.subr.mxu0 0.0
    %1628 = vmatpush1.msra.mxu0 0.0
    %1629 = vmatprep.subr.mxu0 0.0
    %1630 = vmatpush1.msra.mxu0 0.0
    %1631 = vmatprep.subr.mxu0 0.0
    %1632 = vmatpush1.msra.mxu0 0.0
    %1633 = vmatprep.subr.mxu0 0.0
    %1634 = vmatpush1.msra.mxu0 0.0
    %1635 = vmatprep.subr.mxu0 0.0
    %1636 = vmatpush1.msra.mxu0 0.0
    %1637 = vmatprep.subr.mxu0 0.0
    %1638 = vmatpush1.msra.mxu0 0.0
    %1639 = vmatprep.subr.mxu0 0.0
    %1640 = vmatpush1.msra.mxu0 0.0
    %1641 = vmatprep.subr.mxu0 0.0
    %1642 = vmatpush1.msra.mxu0 0.0
    %1643 = vmatprep.subr.mxu0 0.0
    %1644 = vmatpush1.msra.mxu0 0.0
    %1645 = vmatprep.subr.mxu0 0.0
    %1646 = vmatpush1.msra.mxu0 0.0
    %1647 = vmatprep.subr.mxu0 0.0
    %1648 = vmatpush1.msra.mxu0 0.0
    %1649 = vmatprep.subr.mxu0 0.0
    %1650 = vmatpush1.msra.mxu0 0.0
    %1651 = vmatprep.subr.mxu0 0.0
    %1652 = vmatpush1.msra.mxu0 0.0
    %1653 = vmatprep.subr.mxu0 0.0
    %1654 = vmatpush1.msra.mxu0 0.0
    %1655 = vmatprep.subr.mxu0 0.0
    %1656 = vmatpush1.msra.mxu0 0.0
    %1657 = vmatprep.subr.mxu0 0.0
    %1658 = vmatpush1.msra.mxu0 0.0
    %1659 = vmatprep.subr.mxu0 0.0
    %1660 = vmatpush1.msra.mxu0 0.0
    %1661 = vmatprep.subr.mxu0 0.0
    %1662 = vmatpush1.msra.mxu0 0.0
    %1663 = vmatprep.mubr.f32.mxu0 0.0
    %1664 = vmatmul.mubr.f32.gmra.mrb[0].mxu0 %v1588
    %v1665 = vpop.f32.mrb[0].mxu0
    %v1666 = vadd.f32 %v1569, %v1665
    %v1667 = vpop.f32.mrb[0].mxu0
    %1668 = vmatprep.mubr.f32.mxu0 0.0
    %1669 = vmatmul.mubr.f32.gmra.mrb[0].mxu0 %v1591
    %v1670 = vpop.f32.mrb[0].mxu0
    %v1671 = vadd.f32 %v1574, %v1670
    %v1672 = vpop.f32.mrb[0].mxu0
    %1673 = vmatprep.mubr.f32.mxu0 0.0
    %1674 = vmatmul.mubr.f32.gmra.mrb[0].mxu0 %v1594
    %v1675 = vpop.f32.mrb[0].mxu0
    %v1676 = vadd.f32 %v1579, %v1675
    %v1677 = vpop.f32.mrb[0].mxu0
    %1678 = vmatprep.mubr.f32.mxu0 0.0
    %1679 = vmatmul.mubr.f32.gmra.mrb[0].mxu0 %v1597
    %v1680 = vpop.f32.mrb[0].mxu0
    %v1681 = vadd.f32 %v1584, %v1680
    %v1682 = vpop.f32.mrb[0].mxu0
    %1683 = vdwg.mxu0
    %v1684 = vlaneseq
    %v1685 = vshrl.u32 %v1684, 7
    %v1686 = vsub.s32 0, %v1685
    %v1687 = vrot.slane %v1250, %v1686
    %v1688 = vadd.f32 %v1666, %v1687
    %v1689 = vadd.f32 %v1671, %v1687
    %v1690 = vadd.f32 %v1676, %v1687
    %v1691 = vadd.f32 %v1681, %v1687
    %v1692 = vmax.f32 %v1688, 0.0
    %v1693 = vmax.f32 %v1689, 0.0
    %v1694 = vmax.f32 %v1690, 0.0
    %v1695 = vmax.f32 %v1691, 0.0
    %v1696 = vld [vmem:[#allocation2 + $0x298] sm:$0xff]
    %v1697 = vld [vmem:[#allocation2 + $0x2a0] sm:$0xff]
    %v1698 = vld [vmem:[#allocation2 + $0x2a8] sm:$0xff]
    %v1699 = vld [vmem:[#allocation2 + $0x2b0] sm:$0xff]
    %v1700 = vld [vmem:[#allocation2 + $0x2b8] sm:$0xff]
    %v1701 = vld [vmem:[#allocation2 + $0x2c0] sm:$0xff]
    %v1702 = vld [vmem:[#allocation2 + $0x2c8] sm:$0x1]
    %v1703 = vlaneseq
    %v1704 = vshrl.u32 %v1703, 7
    %v1705 = vsub.s32 0, %v1704
    %v1706 = vrot.slane %v1702, %v1705
    %1707 = vmatprep.subr.mxu0 0.0
    %1708 = vmatpush1.msra.mxu0 %v1696
    %1709 = vmatprep.subr.mxu0 0.0
    %1710 = vmatpush1.msra.mxu0 %v1697
    %1711 = vmatprep.subr.mxu0 0.0
    %1712 = vmatpush1.msra.mxu0 %v1698
    %1713 = vmatprep.subr.mxu0 0.0
    %1714 = vmatpush1.msra.mxu0 %v1699
    %1715 = vmatprep.subr.mxu0 0.0
    %1716 = vmatpush1.msra.mxu0 %v1700
    %1717 = vmatprep.subr.mxu0 0.0
    %1718 = vmatpush1.msra.mxu0 %v1701
    %1719 = vmatprep.subr.mxu0 0.0
    %1720 = vmatpush1.msra.mxu0 0.0
    %1721 = vmatprep.subr.mxu0 0.0
    %1722 = vmatpush1.msra.mxu0 0.0
    %1723 = vmatprep.subr.mxu0 0.0
    %1724 = vmatpush1.msra.mxu0 0.0
    %1725 = vmatprep.subr.mxu0 0.0
    %1726 = vmatpush1.msra.mxu0 0.0
    %1727 = vmatprep.subr.mxu0 0.0
    %1728 = vmatpush1.msra.mxu0 0.0
    %1729 = vmatprep.subr.mxu0 0.0
    %1730 = vmatpush1.msra.mxu0 0.0
    %1731 = vmatprep.subr.mxu0 0.0
    %1732 = vmatpush1.msra.mxu0 0.0
    %1733 = vmatprep.subr.mxu0 0.0
    %1734 = vmatpush1.msra.mxu0 0.0
    %1735 = vmatprep.subr.mxu0 0.0
    %1736 = vmatpush1.msra.mxu0 0.0
    %1737 = vmatprep.subr.mxu0 0.0
    %1738 = vmatpush1.msra.mxu0 0.0
    %1739 = vmatprep.subr.mxu0 0.0
    %1740 = vmatpush1.msra.mxu0 0.0
    %1741 = vmatprep.subr.mxu0 0.0
    %1742 = vmatpush1.msra.mxu0 0.0
    %1743 = vmatprep.subr.mxu0 0.0
    %1744 = vmatpush1.msra.mxu0 0.0
    %1745 = vmatprep.subr.mxu0 0.0
    %1746 = vmatpush1.msra.mxu0 0.0
    %1747 = vmatprep.subr.mxu0 0.0
    %1748 = vmatpush1.msra.mxu0 0.0
    %1749 = vmatprep.subr.mxu0 0.0
    %1750 = vmatpush1.msra.mxu0 0.0
    %1751 = vmatprep.subr.mxu0 0.0
    %1752 = vmatpush1.msra.mxu0 0.0
    %1753 = vmatprep.subr.mxu0 0.0
    %1754 = vmatpush1.msra.mxu0 0.0
    %1755 = vmatprep.subr.mxu0 0.0
    %1756 = vmatpush1.msra.mxu0 0.0
    %1757 = vmatprep.subr.mxu0 0.0
    %1758 = vmatpush1.msra.mxu0 0.0
    %1759 = vmatprep.subr.mxu0 0.0
    %1760 = vmatpush1.msra.mxu0 0.0
    %1761 = vmatprep.subr.mxu0 0.0
    %1762 = vmatpush1.msra.mxu0 0.0
    %1763 = vmatprep.subr.mxu0 0.0
    %1764 = vmatpush1.msra.mxu0 0.0
    %1765 = vmatprep.subr.mxu0 0.0
    %1766 = vmatpush1.msra.mxu0 0.0
    %1767 = vmatprep.subr.mxu0 0.0
    %1768 = vmatpush1.msra.mxu0 0.0
    %1769 = vmatprep.subr.mxu0 0.0
    %1770 = vmatpush1.msra.mxu0 0.0
    %1771 = vmatprep.mubr.f32.mxu0 0.0
    %1772 = vmatmul.mubr.f32.gmra.mrb[0].mxu0 %v1273
    %v1773 = vpop.f32.mrb[0].mxu0
    %v1774 = vadd.f32 %v1706, %v1773
    %v1775 = vpop.f32.mrb[0].mxu0
    %1776 = vmatprep.mubr.f32.mxu0 0.0
    %1777 = vmatmul.mubr.f32.gmra.mrb[0].mxu0 %v1276
    %v1778 = vpop.f32.mrb[0].mxu0
    %v1779 = vadd.f32 %v1706, %v1778
    %v1780 = vpop.f32.mrb[0].mxu0
    %1781 = vmatprep.mubr.f32.mxu0 0.0
    %1782 = vmatmul.mubr.f32.gmra.mrb[0].mxu0 %v1279
    %v1783 = vpop.f32.mrb[0].mxu0
    %v1784 = vadd.f32 %v1706, %v1783
    %v1785 = vpop.f32.mrb[0].mxu0
    %1786 = vmatprep.mubr.f32.mxu0 0.0
    %1787 = vmatmul.mubr.f32.gmra.mrb[0].mxu0 %v1282
    %v1788 = vpop.f32.mrb[0].mxu0
    %v1789 = vadd.f32 %v1706, %v1788
    %v1790 = vpop.f32.mrb[0].mxu0
    %1791 = vdwg.mxu0
    %v1792 = vadd.f32 %v1692, %v1774
    %v1793 = vadd.f32 %v1693, %v1779
    %v1794 = vadd.f32 %v1694, %v1784
    %v1795 = vadd.f32 %v1695, %v1789
    %v1796 = vmax.f32 %v1792, 0.0
    %v1797 = vmax.f32 %v1793, 0.0
    %v1798 = vmax.f32 %v1794, 0.0
    %v1799 = vmax.f32 %v1795, 0.0
    %v1800 = vshra.s32 %v31, 4
    %vm1801 = vcmp.eq.s32.totalorder %v1800, %v159
    %v1802 = vsel %vm1801, 0.0625, 0.0
    %v1804 = vsel %vm214, %v1802, 0
    %1806 = vmatprep.subr.mxu0 0.0
    %1807 = vmatpush1.msra.mxu0 %v1796
    %1808 = vmatprep.subr.mxu0 0.0
    %1809 = vmatpush1.msra.mxu0 %v1797
    %1810 = vmatprep.subr.mxu0 0.0
    %1811 = vmatpush1.msra.mxu0 %v1798
    %1812 = vmatprep.subr.mxu0 0.0
    %1813 = vmatpush1.msra.mxu0 %v1799
    %1814 = vmatprep.subr.mxu0 0.0
    %1815 = vmatpush1.msra.mxu0 0.0
    %1816 = vmatprep.subr.mxu0 0.0
    %1817 = vmatpush1.msra.mxu0 0.0
    %1818 = vmatprep.subr.mxu0 0.0
    %1819 = vmatpush1.msra.mxu0 0.0
    %1820 = vmatprep.subr.mxu0 0.0
    %1821 = vmatpush1.msra.mxu0 0.0
    %1822 = vmatprep.subr.mxu0 0.0
    %1823 = vmatpush1.msra.mxu0 0.0
    %1824 = vmatprep.subr.mxu0 0.0
    %1825 = vmatpush1.msra.mxu0 0.0
    %1826 = vmatprep.subr.mxu0 0.0
    %1827 = vmatpush1.msra.mxu0 0.0
    %1828 = vmatprep.subr.mxu0 0.0
    %1829 = vmatpush1.msra.mxu0 0.0
    %1830 = vmatprep.subr.mxu0 0.0
    %1831 = vmatpush1.msra.mxu0 0.0
    %1832 = vmatprep.subr.mxu0 0.0
    %1833 = vmatpush1.msra.mxu0 0.0
    %1834 = vmatprep.subr.mxu0 0.0
    %1835 = vmatpush1.msra.mxu0 0.0
    %1836 = vmatprep.subr.mxu0 0.0
    %1837 = vmatpush1.msra.mxu0 0.0
    %1838 = vmatprep.subr.mxu0 0.0
    %1839 = vmatpush1.msra.mxu0 0.0
    %1840 = vmatprep.subr.mxu0 0.0
    %1841 = vmatpush1.msra.mxu0 0.0
    %1842 = vmatprep.subr.mxu0 0.0
    %1843 = vmatpush1.msra.mxu0 0.0
    %1844 = vmatprep.subr.mxu0 0.0
    %1845 = vmatpush1.msra.mxu0 0.0
    %1846 = vmatprep.subr.mxu0 0.0
    %1847 = vmatpush1.msra.mxu0 0.0
    %1848 = vmatprep.subr.mxu0 0.0
    %1849 = vmatpush1.msra.mxu0 0.0
    %1850 = vmatprep.subr.mxu0 0.0
    %1851 = vmatpush1.msra.mxu0 0.0
    %1852 = vmatprep.subr.mxu0 0.0
    %1853 = vmatpush1.msra.mxu0 0.0
    %1854 = vmatprep.subr.mxu0 0.0
    %1855 = vmatpush1.msra.mxu0 0.0
    %1856 = vmatprep.subr.mxu0 0.0
    %1857 = vmatpush1.msra.mxu0 0.0
    %1858 = vmatprep.subr.mxu0 0.0
    %1859 = vmatpush1.msra.mxu0 0.0
    %1860 = vmatprep.subr.mxu0 0.0
    %1861 = vmatpush1.msra.mxu0 0.0
    %1862 = vmatprep.subr.mxu0 0.0
    %1863 = vmatpush1.msra.mxu0 0.0
    %1864 = vmatprep.subr.mxu0 0.0
    %1865 = vmatpush1.msra.mxu0 0.0
    %1866 = vmatprep.subr.mxu0 0.0
    %1867 = vmatpush1.msra.mxu0 0.0
    %1868 = vmatprep.subr.mxu0 0.0
    %1869 = vmatpush1.msra.mxu0 0.0
    %1870 = vmatprep.mubr.f32.mxu0 0.0
    %1871 = vmatmul.mubr.f32.gmra.mrb[0].mxu0 %v1804
    %v1872 = vpop.f32.mrb[0].mxu0
    %v1873 = vadd.f32 0.0, %v1872
    %v1874 = vpop.f32.mrb[0].mxu0
    %1875 = vdwg.mxu0
    %v1876 = vld [vmem:[#allocation2 + $0x2d0] sm:$0xff]
    %v1877 = vld [vmem:[#allocation2 + $0x2d8] sm:$0xff]
    %v1878 = vld [vmem:[#allocation2 + $0x2e0] sm:$0xff]
    %v1879 = vld [vmem:[#allocation2 + $0x2e8] sm:$0xff]
    %v1880 = vld [vmem:[#allocation2 + $0x2f0] sm:$0x1]
    %v1881 = vlaneseq
    %v1882 = vshrl.u32 %v1881, 7
    %v1883 = vsub.s32 0, %v1882
    %v1884 = vrot.slane %v1880, %v1883
    %v1886 = vsel %vm214, %v1873, 0
    %1888 = vmatprep.subr.mxu0 0.0
    %1889 = vmatpush1.msra.mxu0 %v1876
    %1890 = vmatprep.subr.mxu0 0.0
    %1891 = vmatpush1.msra.mxu0 %v1877
    %1892 = vmatprep.subr.mxu0 0.0
    %1893 = vmatpush1.msra.mxu0 %v1878
    %1894 = vmatprep.subr.mxu0 0.0
    %1895 = vmatpush1.msra.mxu0 %v1879
    %1896 = vmatprep.subr.mxu0 0.0
    %1897 = vmatpush1.msra.mxu0 0.0
    %1898 = vmatprep.subr.mxu0 0.0
    %1899 = vmatpush1.msra.mxu0 0.0
    %1900 = vmatprep.subr.mxu0 0.0
    %1901 = vmatpush1.msra.mxu0 0.0
    %1902 = vmatprep.subr.mxu0 0.0
    %1903 = vmatpush1.msra.mxu0 0.0
    %1904 = vmatprep.subr.mxu0 0.0
    %1905 = vmatpush1.msra.mxu0 0.0
    %1906 = vmatprep.subr.mxu0 0.0
    %1907 = vmatpush1.msra.mxu0 0.0
    %1908 = vmatprep.subr.mxu0 0.0
    %1909 = vmatpush1.msra.mxu0 0.0
    %1910 = vmatprep.subr.mxu0 0.0
    %1911 = vmatpush1.msra.mxu0 0.0
    %1912 = vmatprep.subr.mxu0 0.0
    %1913 = vmatpush1.msra.mxu0 0.0
    %1914 = vmatprep.subr.mxu0 0.0
    %1915 = vmatpush1.msra.mxu0 0.0
    %1916 = vmatprep.subr.mxu0 0.0
    %1917 = vmatpush1.msra.mxu0 0.0
    %1918 = vmatprep.subr.mxu0 0.0
    %1919 = vmatpush1.msra.mxu0 0.0
    %1920 = vmatprep.subr.mxu0 0.0
    %1921 = vmatpush1.msra.mxu0 0.0
    %1922 = vmatprep.subr.mxu0 0.0
    %1923 = vmatpush1.msra.mxu0 0.0
    %1924 = vmatprep.subr.mxu0 0.0
    %1925 = vmatpush1.msra.mxu0 0.0
    %1926 = vmatprep.subr.mxu0 0.0
    %1927 = vmatpush1.msra.mxu0 0.0
    %1928 = vmatprep.subr.mxu0 0.0
    %1929 = vmatpush1.msra.mxu0 0.0
    %1930 = vmatprep.subr.mxu0 0.0
    %1931 = vmatpush1.msra.mxu0 0.0
    %1932 = vmatprep.subr.mxu0 0.0
    %1933 = vmatpush1.msra.mxu0 0.0
    %1934 = vmatprep.subr.mxu0 0.0
    %1935 = vmatpush1.msra.mxu0 0.0
    %1936 = vmatprep.subr.mxu0 0.0
    %1937 = vmatpush1.msra.mxu0 0.0
    %1938 = vmatprep.subr.mxu0 0.0
    %1939 = vmatpush1.msra.mxu0 0.0
    %1940 = vmatprep.subr.mxu0 0.0
    %1941 = vmatpush1.msra.mxu0 0.0
    %1942 = vmatprep.subr.mxu0 0.0
    %1943 = vmatpush1.msra.mxu0 0.0
    %1944 = vmatprep.subr.mxu0 0.0
    %1945 = vmatpush1.msra.mxu0 0.0
    %1946 = vmatprep.subr.mxu0 0.0
    %1947 = vmatpush1.msra.mxu0 0.0
    %1948 = vmatprep.subr.mxu0 0.0
    %1949 = vmatpush1.msra.mxu0 0.0
    %1950 = vmatprep.subr.mxu0 0.0
    %1951 = vmatpush1.msra.mxu0 0.0
    %1952 = vmatprep.mubr.f32.mxu0 0.0
    %1953 = vmatmul.mubr.f32.gmra.mrb[0].mxu0 %v1886
    %v1954 = vpop.f32.mrb[0].mxu0
    %v1955 = vadd.f32 %v1884, %v1954
    %v1956 = vpop.f32.mrb[0].mxu0
    %1957 = vdwg.mxu0
    %v1958 = vmax.f32 %v1955, 0.0
    %v1959 = vld [vmem:[#allocation2 + $0x2f8] sm:$0xff]
    %v1960 = vld [vmem:[#allocation2 + $0x300] sm:$0xff]
    %v1961 = vld [vmem:[#allocation2 + $0x308] sm:$0xff]
    %v1962 = vld [vmem:[#allocation2 + $0x310] sm:$0xff]
    %v1963 = vld [vmem:[#allocation2 + $0x318] sm:$0xff]
    %v1964 = vld [vmem:[#allocation2 + $0x320] sm:$0xff]
    %v1965 = vld [vmem:[#allocation2 + $0x328] sm:$0xff]
    %v1966 = vld [vmem:[#allocation2 + $0x330] sm:$0xff]
    %v1967 = vld [vmem:[#allocation2 + $0x338] sm:$0x1]
    %v1968 = vlaneseq
    %v1969 = vshrl.u32 %v1968, 7
    %v1970 = vsub.s32 0, %v1969
    %v1971 = vrot.slane %v1967, %v1970
    %v1973 = vsel %vm60, %v1958, 0
    %1975 = vmatprep.subr.mxu0 0.0
    %1976 = vmatpush1.msra.mxu0 %v1959
    %1977 = vmatprep.subr.mxu0 0.0
    %1978 = vmatpush1.msra.mxu0 %v1960
    %1979 = vmatprep.subr.mxu0 0.0
    %1980 = vmatpush1.msra.mxu0 %v1961
    %1981 = vmatprep.subr.mxu0 0.0
    %1982 = vmatpush1.msra.mxu0 %v1962
    %1983 = vmatprep.subr.mxu0 0.0
    %1984 = vmatpush1.msra.mxu0 %v1963
    %1985 = vmatprep.subr.mxu0 0.0
    %1986 = vmatpush1.msra.mxu0 %v1964
    %1987 = vmatprep.subr.mxu0 0.0
    %1988 = vmatpush1.msra.mxu0 %v1965
    %1989 = vmatprep.subr.mxu0 0.0
    %1990 = vmatpush1.msra.mxu0 %v1966
    %1991 = vmatprep.subr.mxu0 0.0
    %1992 = vmatpush1.msra.mxu0 0.0
    %1993 = vmatprep.subr.mxu0 0.0
    %1994 = vmatpush1.msra.mxu0 0.0
    %1995 = vmatprep.subr.mxu0 0.0
    %1996 = vmatpush1.msra.mxu0 0.0
    %1997 = vmatprep.subr.mxu0 0.0
    %1998 = vmatpush1.msra.mxu0 0.0
    %1999 = vmatprep.subr.mxu0 0.0
    %2000 = vmatpush1.msra.mxu0 0.0
    %2001 = vmatprep.subr.mxu0 0.0
    %2002 = vmatpush1.msra.mxu0 0.0
    %2003 = vmatprep.subr.mxu0 0.0
    %2004 = vmatpush1.msra.mxu0 0.0
    %2005 = vmatprep.subr.mxu0 0.0
    %2006 = vmatpush1.msra.mxu0 0.0
    %2007 = vmatprep.subr.mxu0 0.0
    %2008 = vmatpush1.msra.mxu0 0.0
    %2009 = vmatprep.subr.mxu0 0.0
    %2010 = vmatpush1.msra.mxu0 0.0
    %2011 = vmatprep.subr.mxu0 0.0
    %2012 = vmatpush1.msra.mxu0 0.0
    %2013 = vmatprep.subr.mxu0 0.0
    %2014 = vmatpush1.msra.mxu0 0.0
    %2015 = vmatprep.subr.mxu0 0.0
    %2016 = vmatpush1.msra.mxu0 0.0
    %2017 = vmatprep.subr.mxu0 0.0
    %2018 = vmatpush1.msra.mxu0 0.0
    %2019 = vmatprep.subr.mxu0 0.0
    %2020 = vmatpush1.msra.mxu0 0.0
    %2021 = vmatprep.subr.mxu0 0.0
    %2022 = vmatpush1.msra.mxu0 0.0
    %2023 = vmatprep.subr.mxu0 0.0
    %2024 = vmatpush1.msra.mxu0 0.0
    %2025 = vmatprep.subr.mxu0 0.0
    %2026 = vmatpush1.msra.mxu0 0.0
    %2027 = vmatprep.subr.mxu0 0.0
    %2028 = vmatpush1.msra.mxu0 0.0
    %2029 = vmatprep.subr.mxu0 0.0
    %2030 = vmatpush1.msra.mxu0 0.0
    %2031 = vmatprep.subr.mxu0 0.0
    %2032 = vmatpush1.msra.mxu0 0.0
    %2033 = vmatprep.subr.mxu0 0.0
    %2034 = vmatpush1.msra.mxu0 0.0
    %2035 = vmatprep.subr.mxu0 0.0
    %2036 = vmatpush1.msra.mxu0 0.0
    %2037 = vmatprep.subr.mxu0 0.0
    %2038 = vmatpush1.msra.mxu0 0.0
    %2039 = vmatprep.mubr.f32.mxu0 0.0
    %2040 = vmatmul.mubr.f32.gmra.mrb[0].mxu0 %v1973
    %v2041 = vpop.f32.mrb[0].mxu0
    %v2042 = vadd.f32 %v1971, %v2041
    %v2043 = vpop.f32.mrb[0].mxu0
    %2044 = vdwg.mxu0
    %vm2045 = vcmask 17408
    %2046 = vst.msk [vmem:[#allocation5] sm:$0x3] %vm2045, %v2042
    // Predicated region
    $region14: #{forward.1} parent=1 // pred_check
      _
    $region15: #{forward.1} parent=1 // pred_check_branch
      %2048 = sbr.rel (0) target = $region17
    $region16: #{forward.1} parent=1 // pred_region
      %s2050 = ssub.s32 32, 32
      %2051 = vsyncadd [#allocation4], %s2050
      %s2053 = sshll.u32 [#allocation5], 4
      %s2054 = int_to_ptr.vmem [resolvable:$true] %s2053
      %2056 = dma.vmem_to_hbm [thread:$0]  %s2054, 32, %s2, [#allocation4]
    $region17: #{forward.1} parent=1 // pred_fallthru
      _
    // Predicated region
    $region18: #{forward.1} parent=1 // pred_check
      _
    $region19: #{forward.1} parent=1 // pred_check_branch
      %2058 = sbr.rel (0) target = $region21
    $region20: #{forward.1} parent=1 // pred_region
      %2059 = dma.done [#allocation4], 32
    $region21: #{forward.1} parent=1 // pred_fallthru
      _
    %2060 = vsyncpa [#allocation3], 1
    %2061 = vsyncpa [#allocation4], 1

</llo_original>
